<compile_context>
chip_gen: v7x
topology: tpu7x:2x2x1
jax: 0.10.0
libtpu: 0.0.40
codegen_flags: <defaults>
</compile_context>

<pallas_src>
import functools

import jax
import jax.numpy as jnp
from jax.experimental import pallas as pl
from jax.experimental.pallas import tpu as pltpu


LANE = 128  # TPU lane width; feature dims are padded to a multiple of this.


def _round_up(v, m):
    return (v + m - 1) // m * m


def _pad_to(a, shape):
    return jnp.pad(a, [(0, s - d) for d, s in zip(a.shape, shape)])


# ---------------------------------------------------------------------------
# Fused two-layer kernel.  One grid step = one (layer, row-tile) pair.
# Grid is (2, n_pad // block_m) with the layer axis OUTERMOST, so every row tile
# of layer 0 (which fills the h scratch) completes before any layer-1 tile runs.
# ---------------------------------------------------------------------------
def _fused_graphsage_kernel(adj_ref, dinv_ref, x_ref, wl_ref, wr_ref, b_ref,
                            o_ref, h_ref, *, block_m):
    """
    adj_ref : [n_pad, n_pad] bf16  0/1 edge-multiplicity counts, resident (one DMA)
    dinv_ref: [n_pad, 1]     f32   1/deg (0 for padded rows), resident
    x_ref   : [n_pad, F]     bf16  input features, resident
    wl_ref  : [1, F, F]      bf16  lin_l weight of the current layer (aggr path)
    wr_ref  : [1, F, F]      bf16  lin_r weight of the current layer (root path)
    b_ref   : [1, 1, F]      f32   bias of the current layer
    o_ref   : [block_m, F]   f32   output tile (only written by layer 1)
    h_ref   : [n_pad, F]     bf16  VMEM scratch holding the hidden activations
    """
    layer = pl.program_id(0)
    row0 = pl.multiple_of(pl.program_id(1) * block_m, block_m)
    rows = pl.ds(row0, block_m)

    a_tile = adj_ref[rows, :]          # [bm, n_pad] bf16 (exact 0/1 counts)
    dinv = dinv_ref[rows, :]           # [bm, 1] f32
    w_l = wl_ref[0]                    # [F, F]
    w_r = wr_ref[0]
    bias = b_ref[0]                    # [1, F]

    def conv(src_all, src_rows):
        # Mean aggregation: f32 MXU accumulation, then exact f32 1/deg scaling.
        aggr = jnp.dot(a_tile, src_all, preferred_element_type=jnp.float32) * dinv
        return (jnp.dot(aggr.astype(jnp.bfloat16), w_l,
                        preferred_element_type=jnp.float32)
                + jnp.dot(src_rows, w_r, preferred_element_type=jnp.float32)
                + bias)

    @pl.when(layer == 0)
    def _():
        out = conv(x_ref[...], x_ref[rows, :])
        # ReLU; F.dropout(p=0.5, training=False) is the identity at inference time.
        # NOTE: padded node rows of h become relu(b1) rather than 0 -- harmless, because
        # their adjacency COLUMNS are zero and those rows are sliced off at the end.
        h_ref[rows, :] = jnp.maximum(out, 0.0).astype(h_ref.dtype)

    @pl.when(layer == 1)
    def _():
        o_ref[...] = conv(h_ref[...], h_ref[rows, :]).astype(o_ref.dtype)


def graphsage_forward(params, x, adj_counts, *, block_m=512):
    """Fused conv1 -> ReLU -> (dropout=id) -> conv2 in a single pallas_call."""
    n, c_in = x.shape
    hidden = params["w1_l"].shape[1]
    c_out = params["w2_l"].shape[1]

    # Common 128-padded feature width so both layers share one kernel body.
    f = max(_round_up(c_in, LANE), _round_up(hidden, LANE), _round_up(c_out, LANE))
    n_pad = _round_up(n, LANE)
    bm = min(block_m, n_pad)
    assert bm % 8 == 0, "block_m must be a multiple of 8 (sublane width)"
    n_pad = _round_up(n_pad, bm)

    bf16, f32 = jnp.bfloat16, jnp.float32

    deg = jnp.sum(adj_counts, axis=1, keepdims=True)
    dinv = (1.0 / jnp.maximum(deg, 1.0)).astype(f32)

    adj_p = _pad_to(adj_counts, (n_pad, n_pad)).astype(bf16)   # exact 0/1 counts
    dinv_p = _pad_to(dinv, (n_pad, 1))                         # f32, 0 on padded rows
    x_p = _pad_to(x, (n_pad, f)).astype(bf16)

    wl = jnp.stack([_pad_to(params["w1_l"], (f, f)),
                    _pad_to(params["w2_l"], (f, f))]).astype(bf16)   # [2, F, F]
    wr = jnp.stack([_pad_to(params["w1_r"], (f, f)),
                    _pad_to(params["w2_r"], (f, f))]).astype(bf16)   # [2, F, F]
    b = jnp.stack([_pad_to(params["b1"], (1, f)),
                   _pad_to(params["b2"], (1, f))]).astype(f32)       # [2, 1, F]

    kernel = functools.partial(_fused_graphsage_kernel, block_m=bm)
    out = pl.pallas_call(
        kernel,
        out_shape=jax.ShapeDtypeStruct((n_pad, f), f32),
        grid=(2, n_pad // bm),                                   # (layer, row tile)
        in_specs=[
            pl.BlockSpec((n_pad, n_pad), lambda l, i: (0, 0)),   # adj: resident, 1 DMA
            pl.BlockSpec((n_pad, 1), lambda l, i: (0, 0)),       # deg_inv: resident
            pl.BlockSpec((n_pad, f), lambda l, i: (0, 0)),       # x: resident
            pl.BlockSpec((1, f, f), lambda l, i: (l, 0, 0)),     # W_l of current layer
            pl.BlockSpec((1, f, f), lambda l, i: (l, 0, 0)),     # W_r of current layer
            pl.BlockSpec((1, 1, f), lambda l, i: (l, 0, 0)),     # bias of current layer
        ],
        out_specs=pl.BlockSpec((bm, f), lambda l, i: (i, 0)),
        scratch_shapes=[pltpu.VMEM((n_pad, f), bf16)],           # hidden activations h
        compiler_params=pltpu.CompilerParams(
            # Layer axis must be sequential (layer 1 reads the h scratch written by all
            # layer-0 tiles); row axis kept 'arbitrary' because that scratch is per-core.
            dimension_semantics=("arbitrary", "arbitrary"),
            vmem_limit_bytes=48 * 1024 * 1024,                   # <= v7x's 64 MiB VMEM
        ),
    )(adj_p, dinv_p, x_p, wl, wr, b)
    return out[:n, :c_out]


def build_adj_counts(edge_index, num_nodes):
    """Dense 0/1 (multiplicity) adjacency from a [2, E] edge_index (src, dst).

    Duplicate edges are counted with multiplicity (matches PyG scatter-mean on
    multigraphs).  Row i holds the in-neighborhood of node i (edge j->i sends x_j).
    The 1/deg normalization is applied inside the kernel in f32, not here.
    """
    src, dst = edge_index[0], edge_index[1]
    adj = jnp.zeros((num_nodes, num_nodes), jnp.float32)
    return adj.at[dst, src].add(1.0)


def init_params(key, in_channels, hidden, out_channels):
    ks = jax.random.split(key, 6)
    s1 = 1.0 / jnp.sqrt(in_channels)
    s2 = 1.0 / jnp.sqrt(hidden)
    return {
        "w1_l": jax.random.normal(ks[0], (in_channels, hidden), jnp.float32) * s1,
        "w1_r": jax.random.normal(ks[1], (in_channels, hidden), jnp.float32) * s1,
        "b1": jax.random.normal(ks[2], (1, hidden), jnp.float32) * 0.01,
        "w2_l": jax.random.normal(ks[3], (hidden, out_channels), jnp.float32) * s2,
        "w2_r": jax.random.normal(ks[4], (hidden, out_channels), jnp.float32) * s2,
        "b2": jax.random.normal(ks[5], (1, out_channels), jnp.float32) * 0.01,
    }


def reference_forward(params, x, adj_counts):
    """Pure-JAX reference mimicking the kernel's bf16 rounding of inputs/intermediates."""
    r = lambda a: a.astype(jnp.bfloat16).astype(jnp.float32)
    deg = jnp.sum(adj_counts, axis=1, keepdims=True)
    dinv = 1.0 / jnp.maximum(deg, 1.0)
    a, xr = r(adj_counts), r(x)
    aggr1 = r((a @ xr) * dinv)
    h = jnp.maximum(aggr1 @ r(params["w1_l"]) + xr @ r(params["w1_r"]) + params["b1"], 0.0)
    h = r(h)
    aggr2 = r((a @ h) * dinv)
    return aggr2 @ r(params["w2_l"]) + h @ r(params["w2_r"]) + params["b2"]


def reference_forward_f32(params, x, adj_counts):
    """Full-f32 reference (true PyG SAGEConv mean semantics), for fidelity bounding."""
    deg = jnp.sum(adj_counts, axis=1, keepdims=True)
    dinv = 1.0 / jnp.maximum(deg, 1.0)
    aggr1 = (adj_counts @ x) * dinv
    h = jnp.maximum(aggr1 @ params["w1_l"] + x @ params["w1_r"] + params["b1"], 0.0)
    aggr2 = (adj_counts @ h) * dinv
    return aggr2 @ params["w2_l"] + h @ params["w2_r"] + params["b2"]


if __name__ == "__main__":
    key = jax.random.PRNGKey(0)
    k_x, k_e, k_p = jax.random.split(key, 3)

    num_nodes = 200      # small synthetic graph (stand-in for the 2000-node pickle)
    in_channels = 8      # node feature dim (opinion features)
    hidden = 128         # SAGEConv(in, 128)
    out_channels = 8     # SAGEConv(128, out)
    num_edges = 800

    x = jax.random.normal(k_x, (num_nodes, in_channels), jnp.float32)
    edge_index = jax.random.randint(k_e, (2, num_edges), 0, num_nodes, jnp.int32)

    adj_counts = build_adj_counts(edge_index, num_nodes)
    params = init_params(k_p, in_channels, hidden, out_channels)

    # block_m=512 is the intended setting for the 2000-node graph; at this demo size it
    # clamps to one 256-row tile per layer (grid = (2, 1)).
    fwd = jax.jit(functools.partial(graphsage_forward, block_m=512))
    out = jax.block_until_ready(fwd(params, x, adj_counts))

    assert out.shape == (num_nodes, out_channels)
    assert bool(jnp.all(jnp.isfinite(out)))

    out_bf16ref = reference_forward(params, x, adj_counts)
    assert jnp.allclose(out, out_bf16ref, atol=5e-2, rtol=5e-2), float(
        jnp.max(jnp.abs(out - out_bf16ref)))

    # Fidelity vs. the exact f32 (PyTorch-equivalent) forward: loose bound, since the
    # only remaining rounding is bf16 features/weights/h (deg_inv now stays f32).
    out_f32ref = reference_forward_f32(params, x, adj_counts)
    assert jnp.allclose(out, out_f32ref, atol=2e-1, rtol=2e-1), float(
        jnp.max(jnp.abs(out - out_f32ref)))

    print("KERNEL_OK")
</pallas_src>

<mosaic_0001>
module attributes {stable_mosaic.version = 11 : i64} {
  func.func @_fused_graphsage_kernel(%arg0: i32, %arg1: i32, %arg2: memref<256x256xbf16, #tpu.memory_space<vmem>>, %arg3: memref<256x1xf32, #tpu.memory_space<vmem>>, %arg4: memref<256x128xbf16, #tpu.memory_space<vmem>>, %arg5: memref<1x128x128xbf16, #tpu.memory_space<vmem>>, %arg6: memref<1x128x128xbf16, #tpu.memory_space<vmem>>, %arg7: memref<1x1x128xf32, #tpu.memory_space<vmem>>, %arg8: memref<256x128xf32, #tpu.memory_space<vmem>>, %arg9: memref<256x128xbf16, #tpu.memory_space<vmem>>) attributes {dimension_semantics = [#tpu.dimension_semantics<arbitrary>, #tpu.dimension_semantics<arbitrary>], iteration_bounds = array<i64: 2, 1>, scalar_prefetch = 0 : i64, scratch_operands = 1 : i64, tpu.core_type = #tpu.core_type<tc>, window_params = [{pipeline_mode = #tpu.pipeline_mode<synchronous>, transform_indices = @transform_0, window_bounds = array<i64: 256, 256>}, {pipeline_mode = #tpu.pipeline_mode<synchronous>, transform_indices = @transform_1, window_bounds = array<i64: 256, 1>}, {pipeline_mode = #tpu.pipeline_mode<synchronous>, transform_indices = @transform_2, window_bounds = array<i64: 256, 128>}, {transform_indices = @transform_3, window_bounds = array<i64: 1, 128, 128>}, {transform_indices = @transform_4, window_bounds = array<i64: 1, 128, 128>}, {transform_indices = @transform_5, window_bounds = array<i64: 1, 1, 128>}, {transform_indices = @transform_6, window_bounds = array<i64: 256, 128>}]} {
    %c256_i32 = arith.constant 256 : i32
    %0 = arith.muli %arg1, %c256_i32 : i32
    %1 = tpu.assume_multiple %0, 256 : i32
    %2 = arith.index_cast %1 : i32 to index
    %c0 = arith.constant 0 : index
    %3 = vector.load %arg2[%2, %c0] : memref<256x256xbf16, #tpu.memory_space<vmem>>, vector<256x256xbf16>
    %4 = arith.index_cast %1 : i32 to index
    %c0_0 = arith.constant 0 : index
    %5 = vector.load %arg3[%4, %c0_0] : memref<256x1xf32, #tpu.memory_space<vmem>>, vector<256x1xf32>
    %c0_1 = arith.constant 0 : index
    %c0_2 = arith.constant 0 : index
    %c0_3 = arith.constant 0 : index
    %6 = vector.load %arg5[%c0_1, %c0_2, %c0_3] : memref<1x128x128xbf16, #tpu.memory_space<vmem>>, vector<1x128x128xbf16>
    %7 = vector.shape_cast %6 : vector<1x128x128xbf16> to vector<128x128xbf16>
    %c0_4 = arith.constant 0 : index
    %c0_5 = arith.constant 0 : index
    %c0_6 = arith.constant 0 : index
    %8 = vector.load %arg6[%c0_4, %c0_5, %c0_6] : memref<1x128x128xbf16, #tpu.memory_space<vmem>>, vector<1x128x128xbf16>
    %9 = vector.shape_cast %8 : vector<1x128x128xbf16> to vector<128x128xbf16>
    %c0_7 = arith.constant 0 : index
    %c0_8 = arith.constant 0 : index
    %c0_9 = arith.constant 0 : index
    %10 = vector.load %arg7[%c0_7, %c0_8, %c0_9] : memref<1x1x128xf32, #tpu.memory_space<vmem>>, vector<1x1x128xf32>
    %11 = vector.shape_cast %10 : vector<1x1x128xf32> to vector<1x128xf32>
    %c0_i32 = arith.constant 0 : i32
    %12 = arith.cmpi eq, %arg0, %c0_i32 : i32
    %13 = arith.extui %12 : i1 to i32
    %c0_i32_10 = arith.constant 0 : i32
    %14 = arith.cmpi ne, %13, %c0_i32_10 : i32
    scf.if %14 {
      %c0_12 = arith.constant 0 : index
      %c0_13 = arith.constant 0 : index
      %18 = vector.load %arg4[%c0_12, %c0_13] : memref<256x128xbf16, #tpu.memory_space<vmem>>, vector<256x128xbf16>
      %19 = arith.index_cast %1 : i32 to index
      %c0_14 = arith.constant 0 : index
      %20 = vector.load %arg4[%19, %c0_14] : memref<256x128xbf16, #tpu.memory_space<vmem>>, vector<256x128xbf16>
      %cst = arith.constant dense<0.000000e+00> : vector<256x128xf32>
      %21 = tpu.matmul %3, %18, %cst {dimension_numbers = #tpu.dot_dimension_numbers<[1], [0], [0], [1], [0, 0, 1, 1], [], []>} : vector<256x256xbf16>, vector<256x128xbf16>, vector<256x128xf32> -> vector<256x128xf32>
      %22 = vector.broadcast %5 : vector<256x1xf32> to vector<256x128xf32>
      %23 = arith.mulf %21, %22 : vector<256x128xf32>
      %24 = arith.truncf %23 : vector<256x128xf32> to vector<256x128xbf16>
      %cst_15 = arith.constant dense<0.000000e+00> : vector<256x128xf32>
      %25 = tpu.matmul %24, %7, %cst_15 {dimension_numbers = #tpu.dot_dimension_numbers<[1], [0], [0], [1], [0, 0, 1, 1], [], []>} : vector<256x128xbf16>, vector<128x128xbf16>, vector<256x128xf32> -> vector<256x128xf32>
      %cst_16 = arith.constant dense<0.000000e+00> : vector<256x128xf32>
      %26 = tpu.matmul %20, %9, %cst_16 {dimension_numbers = #tpu.dot_dimension_numbers<[1], [0], [0], [1], [0, 0, 1, 1], [], []>} : vector<256x128xbf16>, vector<128x128xbf16>, vector<256x128xf32> -> vector<256x128xf32>
      %27 = arith.addf %25, %26 : vector<256x128xf32>
      %28 = vector.broadcast %11 : vector<1x128xf32> to vector<256x128xf32>
      %29 = arith.addf %27, %28 : vector<256x128xf32>
      %cst_17 = arith.constant 0.000000e+00 : f32
      %30 = vector.broadcast %cst_17 : f32 to vector<256x128xf32>
      %31 = arith.maximumf %29, %30 : vector<256x128xf32>
      %32 = arith.truncf %31 : vector<256x128xf32> to vector<256x128xbf16>
      %33 = arith.index_cast %1 : i32 to index
      %c0_18 = arith.constant 0 : index
      %34 = vector.load %arg9[%33, %c0_18] : memref<256x128xbf16, #tpu.memory_space<vmem>>, vector<256x128xbf16>
      tpu.vector_store %arg9[%33, %c0_18], %32 {strides = array<i32>} : memref<256x128xbf16, #tpu.memory_space<vmem>>, vector<256x128xbf16>,
    } else {
    }
    %c1_i32 = arith.constant 1 : i32
    %15 = arith.cmpi eq, %arg0, %c1_i32 : i32
    %16 = arith.extui %15 : i1 to i32
    %c0_i32_11 = arith.constant 0 : i32
    %17 = arith.cmpi ne, %16, %c0_i32_11 : i32
    scf.if %17 {
      %c0_12 = arith.constant 0 : index
      %c0_13 = arith.constant 0 : index
      %18 = vector.load %arg9[%c0_12, %c0_13] : memref<256x128xbf16, #tpu.memory_space<vmem>>, vector<256x128xbf16>
      %19 = arith.index_cast %1 : i32 to index
      %c0_14 = arith.constant 0 : index
      %20 = vector.load %arg9[%19, %c0_14] : memref<256x128xbf16, #tpu.memory_space<vmem>>, vector<256x128xbf16>
      %cst = arith.constant dense<0.000000e+00> : vector<256x128xf32>
      %21 = tpu.matmul %3, %18, %cst {dimension_numbers = #tpu.dot_dimension_numbers<[1], [0], [0], [1], [0, 0, 1, 1], [], []>} : vector<256x256xbf16>, vector<256x128xbf16>, vector<256x128xf32> -> vector<256x128xf32>
      %22 = vector.broadcast %5 : vector<256x1xf32> to vector<256x128xf32>
      %23 = arith.mulf %21, %22 : vector<256x128xf32>
      %24 = arith.truncf %23 : vector<256x128xf32> to vector<256x128xbf16>
      %cst_15 = arith.constant dense<0.000000e+00> : vector<256x128xf32>
      %25 = tpu.matmul %24, %7, %cst_15 {dimension_numbers = #tpu.dot_dimension_numbers<[1], [0], [0], [1], [0, 0, 1, 1], [], []>} : vector<256x128xbf16>, vector<128x128xbf16>, vector<256x128xf32> -> vector<256x128xf32>
      %cst_16 = arith.constant dense<0.000000e+00> : vector<256x128xf32>
      %26 = tpu.matmul %20, %9, %cst_16 {dimension_numbers = #tpu.dot_dimension_numbers<[1], [0], [0], [1], [0, 0, 1, 1], [], []>} : vector<256x128xbf16>, vector<128x128xbf16>, vector<256x128xf32> -> vector<256x128xf32>
      %27 = arith.addf %25, %26 : vector<256x128xf32>
      %28 = vector.broadcast %11 : vector<1x128xf32> to vector<256x128xf32>
      %29 = arith.addf %27, %28 : vector<256x128xf32>
      %c0_17 = arith.constant 0 : index
      %c0_18 = arith.constant 0 : index
      %30 = vector.load %arg8[%c0_17, %c0_18] : memref<256x128xf32, #tpu.memory_space<vmem>>, vector<256x128xf32>
      tpu.vector_store %arg8[%c0_17, %c0_18], %29 {strides = array<i32>} : memref<256x128xf32, #tpu.memory_space<vmem>>, vector<256x128xf32>,
    } else {
    }
    return
  }
  func.func @transform_0(%arg0: i32, %arg1: i32) -> (i32, i32) {
    %c0_i32 = arith.constant 0 : i32
    %c0_i32_0 = arith.constant 0 : i32
    %c0_i32_1 = arith.constant 0 : i32
    return %c0_i32, %c0_i32_0 : i32, i32
  }
  func.func @transform_1(%arg0: i32, %arg1: i32) -> (i32, i32) {
    %c0_i32 = arith.constant 0 : i32
    %c0_i32_0 = arith.constant 0 : i32
    %c0_i32_1 = arith.constant 0 : i32
    return %c0_i32, %c0_i32_0 : i32, i32
  }
  func.func @transform_2(%arg0: i32, %arg1: i32) -> (i32, i32) {
    %c0_i32 = arith.constant 0 : i32
    %c0_i32_0 = arith.constant 0 : i32
    %c0_i32_1 = arith.constant 0 : i32
    return %c0_i32, %c0_i32_0 : i32, i32
  }
  func.func @transform_3(%arg0: i32, %arg1: i32) -> (i32, i32, i32) {
    %c0_i32 = arith.constant 0 : i32
    %c0_i32_0 = arith.constant 0 : i32
    %c0_i32_1 = arith.constant 0 : i32
    return %arg0, %c0_i32, %c0_i32_0 : i32, i32, i32
  }
  func.func @transform_4(%arg0: i32, %arg1: i32) -> (i32, i32, i32) {
    %c0_i32 = arith.constant 0 : i32
    %c0_i32_0 = arith.constant 0 : i32
    %c0_i32_1 = arith.constant 0 : i32
    return %arg0, %c0_i32, %c0_i32_0 : i32, i32, i32
  }
  func.func @transform_5(%arg0: i32, %arg1: i32) -> (i32, i32, i32) {
    %c0_i32 = arith.constant 0 : i32
    %c0_i32_0 = arith.constant 0 : i32
    %c0_i32_1 = arith.constant 0 : i32
    return %arg0, %c0_i32, %c0_i32_0 : i32, i32, i32
  }
  func.func @transform_6(%arg0: i32, %arg1: i32) -> (i32, i32) {
    %c0_i32 = arith.constant 0 : i32
    %c0_i32_0 = arith.constant 0 : i32
    return %arg1, %c0_i32 : i32, i32
  }
}

</mosaic_0001>

<llo_original>
// kernel: graphsage_forward.1
$region0: #{graphsage_forward.1}
  #allocation0 [shape = 'u32[]', space=smem, size = 0x4, offset = 0x4, fixed_abs, tag = 'smem constant byte address 0x4 - core index']
  #allocation1 [shape = 'u32[144,128]{1,0:T(1,128)}', space=vmem, size = 0x12000, scoped, tag = 'internal scratch']
  #allocation2 [shape = 'bf16[256,128]{1,0:T(16,128)(2,1)}', space=vmem, size = 0x10000, scoped, tag = 'scratch operand']
  %s0 = inlined_call_operand.vmem [shape: bf16[256,256], index: 0, kind: input, shape index: {}]
  %s1 = inlined_call_operand.vmem [shape: f32[256,1], index: 1, kind: input, shape index: {}]
  %s2 = inlined_call_operand.vmem [shape: bf16[256,128], index: 2, kind: input, shape index: {}]
  %s3 = inlined_call_operand.vmem [shape: bf16[2,128,128], index: 3, kind: input, shape index: {}]
  %s4 = inlined_call_operand.vmem [shape: bf16[2,128,128], index: 4, kind: input, shape index: {}]
  %s5 = inlined_call_operand.vmem [shape: f32[2,1,128], index: 5, kind: input, shape index: {}]
  %s6 = inlined_call_operand.vmem [shape: f32[256,128], index: 6, kind: output, shape index: {}]
  %s7 = sld [smem:[#allocation0]]
  $region65: #{graphsage_forward.1} parent=0
    _
  %s9 = ssub.s32 1, %s7
  %s10 = scalar_select 0, %s9, %s7
  loop: start=0, step=1, limit=4
  $region2: #{graphsage_forward.1} parent=0 // loop_pre_header
    _
  $region3: #{graphsage_forward.1} parent=0 // loop_header
    %s12 = sphi 0, %s16
    %p13 = scmp.ge.s32.totalorder %s12, 4
    %s19 = sphi 0, %s31
    %s20 = sphi 0, %s27
    %s21 = sphi 0, %s19
    %s22 = sphi 0, %s20
    %s23 = sphi 0, %s21
    %s24 = sphi 0, %s22
    %s32 = sphi 0, %s32
    %s34 = sphi 0, %s32
    %s35 = sphi 0, %s34
    %s49 = sphi 0, %s35
    %s53 = sphi 0, %s53
    %s55 = sphi 0, %s53
    %s56 = sphi 0, %s55
    %s70 = sphi 0, %s56
    %s74 = sphi 0, %s74
    %s76 = sphi 0, %s74
    %s77 = sphi 0, %s76
    %s91 = sphi 0, %s77
    %s97 = sphi 0, %s99
    %s100 = sphi 0, %s97
    %s101 = sphi 0, %s100
    %s117 = sphi 0, %s101
    %s123 = sphi 0, %s125
    %s126 = sphi 0, %s123
    %s127 = sphi 0, %s126
    %s143 = sphi 0, %s127
    %s149 = sphi 0, %s151
    %s152 = sphi 0, %s149
    %s153 = sphi 0, %s152
    %s169 = sphi 0, %s153
    %s175 = sphi 0, %s177
    %s178 = sphi 0, %s175
    %s179 = sphi 0, %s178
    %s195 = sphi 0, %s179
  $region4: #{graphsage_forward.1} parent=0 // loop_header_branch
    %15 = sbr.rel (%p13) target = $region8
  $region5: #{graphsage_forward.1} parent=0 // loop_body
    %s17 = ssub.s32 %s12, 1
    %s18 = ssub.s32 %s12, 2
    %s25 = sadd.s32 1, %s20
    %p26 = scmp.ge.s32.totalorder %s25, 1
    %s27 = scalar_select %p26, 0, %s25
    %s28 = sadd.s32 1, %s19
    %s29 = scalar_select %p26, %s28, %s19
    %p30 = scmp.ge.s32.totalorder %s29, 2
    %s31 = scalar_select %p30, 0, %s29
    %s33 = sadd.s32 %s32, 1
    %p36 = scmp.eq.s32.totalorder %s12, 1
    %p37 = scmp.ne.s32.totalorder %s32, %s34
    %p38 = scmp.eq.s32.totalorder %s12, 0
    %p39 = por %p37, %p38
    %p40 = scmp.ne.s32.totalorder %s32, %s34
    %p41 = scmp.eq.s32.totalorder %s17, 1
    %p42 = por %p40, %p41
    %p43 = scmp.ne.s32.totalorder %s34, %s35
    %p44 = scmp.eq.s32.totalorder %s17, 0
    %p45 = por %p43, %p44
    %p46 = scmp.ne.s32.totalorder %s34, %s35
    %p47 = scmp.eq.s32.totalorder %s18, 1
    %p48 = por %p46, %p47
    %p50 = scmp.ne.s32.totalorder %s35, %s49
    %p51 = scmp.eq.s32.totalorder %s18, 0
    %p52 = por %p50, %p51
    %s54 = sadd.s32 %s53, 1
    %p57 = scmp.eq.s32.totalorder %s12, 1
    %p58 = scmp.ne.s32.totalorder %s53, %s55
    %p59 = scmp.eq.s32.totalorder %s12, 0
    %p60 = por %p58, %p59
    %p61 = scmp.ne.s32.totalorder %s53, %s55
    %p62 = scmp.eq.s32.totalorder %s17, 1
    %p63 = por %p61, %p62
    %p64 = scmp.ne.s32.totalorder %s55, %s56
    %p65 = scmp.eq.s32.totalorder %s17, 0
    %p66 = por %p64, %p65
    %p67 = scmp.ne.s32.totalorder %s55, %s56
    %p68 = scmp.eq.s32.totalorder %s18, 1
    %p69 = por %p67, %p68
    %p71 = scmp.ne.s32.totalorder %s56, %s70
    %p72 = scmp.eq.s32.totalorder %s18, 0
    %p73 = por %p71, %p72
    %s75 = sadd.s32 %s74, 1
    %p78 = scmp.eq.s32.totalorder %s12, 1
    %p79 = scmp.ne.s32.totalorder %s74, %s76
    %p80 = scmp.eq.s32.totalorder %s12, 0
    %p81 = por %p79, %p80
    %p82 = scmp.ne.s32.totalorder %s74, %s76
    %p83 = scmp.eq.s32.totalorder %s17, 1
    %p84 = por %p82, %p83
    %p85 = scmp.ne.s32.totalorder %s76, %s77
    %p86 = scmp.eq.s32.totalorder %s17, 0
    %p87 = por %p85, %p86
    %p88 = scmp.ne.s32.totalorder %s76, %s77
    %p89 = scmp.eq.s32.totalorder %s18, 1
    %p90 = por %p88, %p89
    %p92 = scmp.ne.s32.totalorder %s77, %s91
    %p93 = scmp.eq.s32.totalorder %s18, 0
    %p94 = por %p92, %p93
    %s95 = ssub.s32 %s19, %s31
    %p96 = scmp.eq.s32.totalorder %s95, 0
    %s98 = sadd.s32 %s97, 1
    %s99 = scalar_select %p96, %s97, %s98
    %p102 = pneg %p96
    %p103 = scmp.eq.s32.totalorder %s12, 1
    %p104 = por %p102, %p103
    %p105 = scmp.ne.s32.totalorder %s97, %s100
    %p106 = scmp.eq.s32.totalorder %s12, 0
    %p107 = por %p105, %p106
    %p108 = scmp.ne.s32.totalorder %s97, %s100
    %p109 = scmp.eq.s32.totalorder %s17, 1
    %p110 = por %p108, %p109
    %p111 = scmp.ne.s32.totalorder %s100, %s101
    %p112 = scmp.eq.s32.totalorder %s17, 0
    %p113 = por %p111, %p112
    %p114 = scmp.ne.s32.totalorder %s100, %s101
    %p115 = scmp.eq.s32.totalorder %s18, 1
    %p116 = por %p114, %p115
    %p118 = scmp.ne.s32.totalorder %s101, %s117
    %p119 = scmp.eq.s32.totalorder %s18, 0
    %p120 = por %p118, %p119
    %s121 = ssub.s32 %s19, %s31
    %p122 = scmp.eq.s32.totalorder %s121, 0
    %s124 = sadd.s32 %s123, 1
    %s125 = scalar_select %p122, %s123, %s124
    %p128 = pneg %p122
    %p129 = scmp.eq.s32.totalorder %s12, 1
    %p130 = por %p128, %p129
    %p131 = scmp.ne.s32.totalorder %s123, %s126
    %p132 = scmp.eq.s32.totalorder %s12, 0
    %p133 = por %p131, %p132
    %p134 = scmp.ne.s32.totalorder %s123, %s126
    %p135 = scmp.eq.s32.totalorder %s17, 1
    %p136 = por %p134, %p135
    %p137 = scmp.ne.s32.totalorder %s126, %s127
    %p138 = scmp.eq.s32.totalorder %s17, 0
    %p139 = por %p137, %p138
    %p140 = scmp.ne.s32.totalorder %s126, %s127
    %p141 = scmp.eq.s32.totalorder %s18, 1
    %p142 = por %p140, %p141
    %p144 = scmp.ne.s32.totalorder %s127, %s143
    %p145 = scmp.eq.s32.totalorder %s18, 0
    %p146 = por %p144, %p145
    %s147 = ssub.s32 %s19, %s31
    %p148 = scmp.eq.s32.totalorder %s147, 0
    %s150 = sadd.s32 %s149, 1
    %s151 = scalar_select %p148, %s149, %s150
    %p154 = pneg %p148
    %p155 = scmp.eq.s32.totalorder %s12, 1
    %p156 = por %p154, %p155
    %p157 = scmp.ne.s32.totalorder %s149, %s152
    %p158 = scmp.eq.s32.totalorder %s12, 0
    %p159 = por %p157, %p158
    %p160 = scmp.ne.s32.totalorder %s149, %s152
    %p161 = scmp.eq.s32.totalorder %s17, 1
    %p162 = por %p160, %p161
    %p163 = scmp.ne.s32.totalorder %s152, %s153
    %p164 = scmp.eq.s32.totalorder %s17, 0
    %p165 = por %p163, %p164
    %p166 = scmp.ne.s32.totalorder %s152, %s153
    %p167 = scmp.eq.s32.totalorder %s18, 1
    %p168 = por %p166, %p167
    %p170 = scmp.ne.s32.totalorder %s153, %s169
    %p171 = scmp.eq.s32.totalorder %s18, 0
    %p172 = por %p170, %p171
    %s173 = ssub.s32 %s20, %s27
    %p174 = scmp.eq.s32.totalorder %s173, 0
    %s176 = sadd.s32 %s175, 1
    %s177 = scalar_select %p174, %s175, %s176
    %p180 = pneg %p174
    %p181 = scmp.eq.s32.totalorder %s12, 1
    %p182 = por %p180, %p181
    %p183 = scmp.ne.s32.totalorder %s175, %s178
    %p184 = scmp.eq.s32.totalorder %s12, 0
    %p185 = por %p183, %p184
    %p186 = scmp.ne.s32.totalorder %s175, %s178
    %p187 = scmp.eq.s32.totalorder %s17, 1
    %p188 = por %p186, %p187
    %p189 = scmp.ne.s32.totalorder %s178, %s179
    %p190 = scmp.eq.s32.totalorder %s17, 0
    %p191 = por %p189, %p190
    %p192 = scmp.ne.s32.totalorder %s178, %s179
    %p193 = scmp.eq.s32.totalorder %s18, 1
    %p194 = por %p192, %p193
    %p196 = scmp.ne.s32.totalorder %s179, %s195
    %p197 = scmp.eq.s32.totalorder %s18, 0
    %p198 = por %p196, %p197
    %p199 = scmp.le.s32.totalorder 1, %s12
    %p200 = scmp.lt.s32.totalorder %s12, 3
    %p201 = pnand %p199, %p200
    %p202 = pneg %p201
    // Predicated region
    $region9: #{graphsage_forward.1} parent=5 // pred_check
      _
    $region10: #{graphsage_forward.1} parent=5 // pred_check_branch
      %204 = sbr.rel (%p201) target = $region12
    $region11: #{graphsage_forward.1} parent=5 // pred_region
      %s205 = ssub.s32 %s12, 1
      // Predicated region
      $region13: #{graphsage_forward.1} parent=11 // pred_check
        %p206 = pneg %p45
      $region14: #{graphsage_forward.1} parent=11 // pred_check_branch
        %208 = sbr.rel (%p206) target = $region16
      $region15: #{graphsage_forward.1} parent=11 // pred_region
        _
      $region16: #{graphsage_forward.1} parent=11 // pred_fallthru
        _
      // Predicated region
      $region17: #{graphsage_forward.1} parent=11 // pred_check
        %p209 = pneg %p66
      $region18: #{graphsage_forward.1} parent=11 // pred_check_branch
        %211 = sbr.rel (%p209) target = $region20
      $region19: #{graphsage_forward.1} parent=11 // pred_region
        _
      $region20: #{graphsage_forward.1} parent=11 // pred_fallthru
        _
      // Predicated region
      $region21: #{graphsage_forward.1} parent=11 // pred_check
        %p212 = pneg %p87
      $region22: #{graphsage_forward.1} parent=11 // pred_check_branch
        %214 = sbr.rel (%p212) target = $region24
      $region23: #{graphsage_forward.1} parent=11 // pred_region
        _
      $region24: #{graphsage_forward.1} parent=11 // pred_fallthru
        _
    $region12: #{graphsage_forward.1} parent=5 // pred_fallthru
      _
    %p215 = scmp.lt.s32.totalorder %s12, 2
    // Predicated region
    $region25: #{graphsage_forward.1} parent=5 // pred_check
      %p216 = pneg %p215
    $region26: #{graphsage_forward.1} parent=5 // pred_check_branch
      %218 = sbr.rel (%p216) target = $region28
    $region27: #{graphsage_forward.1} parent=5 // pred_region
      // Predicated region
      $region29: #{graphsage_forward.1} parent=27 // pred_check
        %p219 = pneg %p107
      $region30: #{graphsage_forward.1} parent=27 // pred_check_branch
        %221 = sbr.rel (%p219) target = $region32
      $region31: #{graphsage_forward.1} parent=27 // pred_region
        %p222 = scmp.lt.s32.totalorder %s19, 1
        %s223 = scalar_select %p222, %s19, 1
        %s224 = smul.addr %s223, 16
        %s225 = smul.addr %s224, 4
        %s226 = scalar_lea.vmem %s3, %s225
      $region32: #{graphsage_forward.1} parent=27 // pred_fallthru
        _
      // Predicated region
      $region33: #{graphsage_forward.1} parent=27 // pred_check
        %p227 = pneg %p133
      $region34: #{graphsage_forward.1} parent=27 // pred_check_branch
        %229 = sbr.rel (%p227) target = $region36
      $region35: #{graphsage_forward.1} parent=27 // pred_region
        %p230 = scmp.lt.s32.totalorder %s19, 1
        %s231 = scalar_select %p230, %s19, 1
        %s232 = smul.addr %s231, 16
        %s233 = smul.addr %s232, 4
        %s234 = scalar_lea.vmem %s4, %s233
      $region36: #{graphsage_forward.1} parent=27 // pred_fallthru
        _
      // Predicated region
      $region37: #{graphsage_forward.1} parent=27 // pred_check
        %p235 = pneg %p159
      $region38: #{graphsage_forward.1} parent=27 // pred_check_branch
        %237 = sbr.rel (%p235) target = $region40
      $region39: #{graphsage_forward.1} parent=27 // pred_region
        %p238 = scmp.lt.s32.totalorder %s19, 1
        %s239 = scalar_select %p238, %s19, 1
        %s240 = scalar_lea.vmem %s5, %s239
      $region40: #{graphsage_forward.1} parent=27 // pred_fallthru
        _
    $region28: #{graphsage_forward.1} parent=5 // pred_fallthru
      _
    %p241 = scmp.le.s32.totalorder 1, %s12
    %p242 = scmp.lt.s32.totalorder %s12, 3
    %p243 = pnand %p241, %p242
    %p244 = pneg %p243
    // Predicated region
    $region41: #{graphsage_forward.1} parent=5 // pred_check
      _
    $region42: #{graphsage_forward.1} parent=5 // pred_check_branch
      %246 = sbr.rel (%p243) target = $region44
    $region43: #{graphsage_forward.1} parent=5 // pred_region
      %s247 = ssub.s32 %s12, 1
      %p248 = pneg %p45
      %p249 = pneg %p42
      %p250 = pneg %p66
      %p251 = pneg %p63
      %p252 = pneg %p87
      %p253 = pneg %p84
      %p254 = scmp.lt.s32.totalorder %s21, 1
      %s255 = scalar_select %p254, %s21, 1
      %s256 = smul.addr %s255, 16
      %s257 = smul.addr %s256, 4
      %s258 = scalar_lea.vmem %s3, %s257
      %p259 = pneg %p113
      %p260 = pneg %p110
      %p261 = scmp.lt.s32.totalorder %s21, 1
      %s262 = scalar_select %p261, %s21, 1
      %s263 = smul.addr %s262, 16
      %s264 = smul.addr %s263, 4
      %s265 = scalar_lea.vmem %s4, %s264
      %p266 = pneg %p139
      %p267 = pneg %p136
      %p268 = scmp.lt.s32.totalorder %s21, 1
      %s269 = scalar_select %p268, %s21, 1
      %s270 = scalar_lea.vmem %s5, %s269
      %p271 = pneg %p165
      %p272 = pneg %p162
      %p273 = pneg %p191
      %p274 = pneg %p188
      %s275 = smul.u32 32, %s22
      %p276 = scmp.lt.s32.totalorder %s275, 31
      %s277 = scalar_select %p276, %s275, 31
      %s278 = smul.addr %s277, 8
      %s279 = scalar_lea.vmem %s6, %s278
      %p280 = scmp.lt.s32.totalorder %s21, 1
      %s281 = scalar_select %p280, %s21, 1
      %s282 = smul.addr %s281, 16
      %s283 = smul.addr %s282, 4
      %s284 = scalar_lea.vmem %s3, %s283
      %p285 = scmp.lt.s32.totalorder %s21, 1
      %s286 = scalar_select %p285, %s21, 1
      %s287 = smul.addr %s286, 16
      %s288 = smul.addr %s287, 4
      %s289 = scalar_lea.vmem %s4, %s288
      %p290 = scmp.lt.s32.totalorder %s21, 1
      %s291 = scalar_select %p290, %s21, 1
      %s292 = scalar_lea.vmem %s5, %s291
      %s293 = smul.u32 32, %s22
      %p294 = scmp.lt.s32.totalorder %s293, 31
      %s295 = scalar_select %p294, %s293, 31
      %s296 = smul.addr %s295, 8
      %s297 = scalar_lea.vmem %s6, %s296
      %s298 = smul.u32 32, %s22
      %s300 = smul.u32 %s22, 256
      %s301 = sshra.s32 %s300, 3
      %s302 = sand.u32 %s300, 7
      %s303 = smul.u32 %s301, 2
      %s304 = smul.addr %s303, 4
      %s305 = scalar_lea.vmem %s0, %s304
      %v306 = vld [vmem:[%s305] sm:$0xff]
      %v307 = vld [vmem:[%s305 + $0x8] sm:$0xff]
      %v308 = vld [vmem:[%s305 + $0x10] sm:$0xff]
      %v309 = vld [vmem:[%s305 + $0x18] sm:$0xff]
      %v310 = vld [vmem:[%s305 + $0x20] sm:$0xff]
      %v311 = vld [vmem:[%s305 + $0x28] sm:$0xff]
      %v312 = vld [vmem:[%s305 + $0x30] sm:$0xff]
      %v313 = vld [vmem:[%s305 + $0x38] sm:$0xff]
      %v314 = vld [vmem:[%s305 + $0x40] sm:$0xff]
      %v315 = vld [vmem:[%s305 + $0x48] sm:$0xff]
      %v316 = vld [vmem:[%s305 + $0x50] sm:$0xff]
      %v317 = vld [vmem:[%s305 + $0x58] sm:$0xff]
      %v318 = vld [vmem:[%s305 + $0x60] sm:$0xff]
      %v319 = vld [vmem:[%s305 + $0x68] sm:$0xff]
      %v320 = vld [vmem:[%s305 + $0x70] sm:$0xff]
      %v321 = vld [vmem:[%s305 + $0x78] sm:$0xff]
      %v322 = vld [vmem:[%s305 + $0x80] sm:$0xff]
      %v323 = vld [vmem:[%s305 + $0x88] sm:$0xff]
      %v324 = vld [vmem:[%s305 + $0x90] sm:$0xff]
      %v325 = vld [vmem:[%s305 + $0x98] sm:$0xff]
      %v326 = vld [vmem:[%s305 + $0xa0] sm:$0xff]
      %v327 = vld [vmem:[%s305 + $0xa8] sm:$0xff]
      %v328 = vld [vmem:[%s305 + $0xb0] sm:$0xff]
      %v329 = vld [vmem:[%s305 + $0xb8] sm:$0xff]
      %v330 = vld [vmem:[%s305 + $0xc0] sm:$0xff]
      %v331 = vld [vmem:[%s305 + $0xc8] sm:$0xff]
      %v332 = vld [vmem:[%s305 + $0xd0] sm:$0xff]
      %v333 = vld [vmem:[%s305 + $0xd8] sm:$0xff]
      %v334 = vld [vmem:[%s305 + $0xe0] sm:$0xff]
      %v335 = vld [vmem:[%s305 + $0xe8] sm:$0xff]
      %v336 = vld [vmem:[%s305 + $0xf0] sm:$0xff]
      %v337 = vld [vmem:[%s305 + $0xf8] sm:$0xff]
      %s338 = scalar_lea.vmem %s1, %s300
      %v339 = vld [vmem:[%s338] sm:$0xff]
      %v340 = vld [vmem:[%s338 + $0x8] sm:$0xff]
      %v341 = vld [vmem:[%s338 + $0x10] sm:$0xff]
      %v342 = vld [vmem:[%s338 + $0x18] sm:$0xff]
      %v343 = vld [vmem:[%s338 + $0x20] sm:$0xff]
      %v344 = vld [vmem:[%s338 + $0x28] sm:$0xff]
      %v345 = vld [vmem:[%s338 + $0x30] sm:$0xff]
      %v346 = vld [vmem:[%s338 + $0x38] sm:$0xff]
      %v347 = vld [vmem:[%s338 + $0x40] sm:$0xff]
      %v348 = vld [vmem:[%s338 + $0x48] sm:$0xff]
      %v349 = vld [vmem:[%s338 + $0x50] sm:$0xff]
      %v350 = vld [vmem:[%s338 + $0x58] sm:$0xff]
      %v351 = vld [vmem:[%s338 + $0x60] sm:$0xff]
      %v352 = vld [vmem:[%s338 + $0x68] sm:$0xff]
      %v353 = vld [vmem:[%s338 + $0x70] sm:$0xff]
      %v354 = vld [vmem:[%s338 + $0x78] sm:$0xff]
      %v355 = vld [vmem:[%s338 + $0x80] sm:$0xff]
      %v356 = vld [vmem:[%s338 + $0x88] sm:$0xff]
      %v357 = vld [vmem:[%s338 + $0x90] sm:$0xff]
      %v358 = vld [vmem:[%s338 + $0x98] sm:$0xff]
      %v359 = vld [vmem:[%s338 + $0xa0] sm:$0xff]
      %v360 = vld [vmem:[%s338 + $0xa8] sm:$0xff]
      %v361 = vld [vmem:[%s338 + $0xb0] sm:$0xff]
      %v362 = vld [vmem:[%s338 + $0xb8] sm:$0xff]
      %v363 = vld [vmem:[%s338 + $0xc0] sm:$0xff]
      %v364 = vld [vmem:[%s338 + $0xc8] sm:$0xff]
      %v365 = vld [vmem:[%s338 + $0xd0] sm:$0xff]
      %v366 = vld [vmem:[%s338 + $0xd8] sm:$0xff]
      %v367 = vld [vmem:[%s338 + $0xe0] sm:$0xff]
      %v368 = vld [vmem:[%s338 + $0xe8] sm:$0xff]
      %v369 = vld [vmem:[%s338 + $0xf0] sm:$0xff]
      %v370 = vld [vmem:[%s338 + $0xf8] sm:$0xff]
      %v371 = vld [vmem:[%s284] sm:$0xf]
      %v372 = vld [vmem:[%s284 + $0x4] sm:$0xf]
      %v373 = vld [vmem:[%s284 + $0x8] sm:$0xf]
      %v374 = vld [vmem:[%s284 + $0xc] sm:$0xf]
      %v375 = vld [vmem:[%s284 + $0x10] sm:$0xf]
      %v376 = vld [vmem:[%s284 + $0x14] sm:$0xf]
      %v377 = vld [vmem:[%s284 + $0x18] sm:$0xf]
      %v378 = vld [vmem:[%s284 + $0x1c] sm:$0xf]
      %v379 = vld [vmem:[%s284 + $0x20] sm:$0xf]
      %v380 = vld [vmem:[%s284 + $0x24] sm:$0xf]
      %v381 = vld [vmem:[%s284 + $0x28] sm:$0xf]
      %v382 = vld [vmem:[%s284 + $0x2c] sm:$0xf]
      %v383 = vld [vmem:[%s284 + $0x30] sm:$0xf]
      %v384 = vld [vmem:[%s284 + $0x34] sm:$0xf]
      %v385 = vld [vmem:[%s284 + $0x38] sm:$0xf]
      %v386 = vld [vmem:[%s284 + $0x3c] sm:$0xf]
      %v387 = vld [vmem:[%s289] sm:$0xf]
      %v388 = vld [vmem:[%s289 + $0x4] sm:$0xf]
      %v389 = vld [vmem:[%s289 + $0x8] sm:$0xf]
      %v390 = vld [vmem:[%s289 + $0xc] sm:$0xf]
      %v391 = vld [vmem:[%s289 + $0x10] sm:$0xf]
      %v392 = vld [vmem:[%s289 + $0x14] sm:$0xf]
      %v393 = vld [vmem:[%s289 + $0x18] sm:$0xf]
      %v394 = vld [vmem:[%s289 + $0x1c] sm:$0xf]
      %v395 = vld [vmem:[%s289 + $0x20] sm:$0xf]
      %v396 = vld [vmem:[%s289 + $0x24] sm:$0xf]
      %v397 = vld [vmem:[%s289 + $0x28] sm:$0xf]
      %v398 = vld [vmem:[%s289 + $0x2c] sm:$0xf]
      %v399 = vld [vmem:[%s289 + $0x30] sm:$0xf]
      %v400 = vld [vmem:[%s289 + $0x34] sm:$0xf]
      %v401 = vld [vmem:[%s289 + $0x38] sm:$0xf]
      %v402 = vld [vmem:[%s289 + $0x3c] sm:$0xf]
      %v403 = vld [vmem:[%s292] sm:$0x1]
      %p404 = scmp.eq.s32.totalorder %s21, 0
      // Predicated region
      $region45: #{graphsage_forward.1} parent=43 // pred_check
        %p405 = pneg %p404
      $region46: #{graphsage_forward.1} parent=43 // pred_check_branch
        %407 = sbr.rel (%p405) target = $region48
      $region47: #{graphsage_forward.1} parent=43 // pred_region
        %v408 = vld [vmem:[%s2] sm:$0xf]
        %v409 = vld [vmem:[%s2 + $0x4] sm:$0xf]
        %v410 = vld [vmem:[%s2 + $0x8] sm:$0xf]
        %v411 = vld [vmem:[%s2 + $0xc] sm:$0xf]
        %v412 = vld [vmem:[%s2 + $0x10] sm:$0xf]
        %v413 = vld [vmem:[%s2 + $0x14] sm:$0xf]
        %v414 = vld [vmem:[%s2 + $0x18] sm:$0xf]
        %v415 = vld [vmem:[%s2 + $0x1c] sm:$0xf]
        %v416 = vld [vmem:[%s2 + $0x20] sm:$0xf]
        %v417 = vld [vmem:[%s2 + $0x24] sm:$0xf]
        %v418 = vld [vmem:[%s2 + $0x28] sm:$0xf]
        %v419 = vld [vmem:[%s2 + $0x2c] sm:$0xf]
        %v420 = vld [vmem:[%s2 + $0x30] sm:$0xf]
        %v421 = vld [vmem:[%s2 + $0x34] sm:$0xf]
        %v422 = vld [vmem:[%s2 + $0x38] sm:$0xf]
        %v423 = vld [vmem:[%s2 + $0x3c] sm:$0xf]
        %v424 = vld [vmem:[%s2 + $0x40] sm:$0xf]
        %v425 = vld [vmem:[%s2 + $0x44] sm:$0xf]
        %v426 = vld [vmem:[%s2 + $0x48] sm:$0xf]
        %v427 = vld [vmem:[%s2 + $0x4c] sm:$0xf]
        %v428 = vld [vmem:[%s2 + $0x50] sm:$0xf]
        %v429 = vld [vmem:[%s2 + $0x54] sm:$0xf]
        %v430 = vld [vmem:[%s2 + $0x58] sm:$0xf]
        %v431 = vld [vmem:[%s2 + $0x5c] sm:$0xf]
        %v432 = vld [vmem:[%s2 + $0x60] sm:$0xf]
        %v433 = vld [vmem:[%s2 + $0x64] sm:$0xf]
        %v434 = vld [vmem:[%s2 + $0x68] sm:$0xf]
        %v435 = vld [vmem:[%s2 + $0x6c] sm:$0xf]
        %v436 = vld [vmem:[%s2 + $0x70] sm:$0xf]
        %v437 = vld [vmem:[%s2 + $0x74] sm:$0xf]
        %v438 = vld [vmem:[%s2 + $0x78] sm:$0xf]
        %v439 = vld [vmem:[%s2 + $0x7c] sm:$0xf]
        %s440 = smul.addr %s301, 4
        %s441 = scalar_lea.vmem %s2, %s440
        %v442 = vld [vmem:[%s441] sm:$0xf]
        %v443 = vld [vmem:[%s441 + $0x4] sm:$0xf]
        %v444 = vld [vmem:[%s441 + $0x8] sm:$0xf]
        %v445 = vld [vmem:[%s441 + $0xc] sm:$0xf]
        %v446 = vld [vmem:[%s441 + $0x10] sm:$0xf]
        %v447 = vld [vmem:[%s441 + $0x14] sm:$0xf]
        %v448 = vld [vmem:[%s441 + $0x18] sm:$0xf]
        %v449 = vld [vmem:[%s441 + $0x1c] sm:$0xf]
        %v450 = vld [vmem:[%s441 + $0x20] sm:$0xf]
        %v451 = vld [vmem:[%s441 + $0x24] sm:$0xf]
        %v452 = vld [vmem:[%s441 + $0x28] sm:$0xf]
        %v453 = vld [vmem:[%s441 + $0x2c] sm:$0xf]
        %v454 = vld [vmem:[%s441 + $0x30] sm:$0xf]
        %v455 = vld [vmem:[%s441 + $0x34] sm:$0xf]
        %v456 = vld [vmem:[%s441 + $0x38] sm:$0xf]
        %v457 = vld [vmem:[%s441 + $0x3c] sm:$0xf]
        %v458 = vld [vmem:[%s441 + $0x40] sm:$0xf]
        %v459 = vld [vmem:[%s441 + $0x44] sm:$0xf]
        %v460 = vld [vmem:[%s441 + $0x48] sm:$0xf]
        %v461 = vld [vmem:[%s441 + $0x4c] sm:$0xf]
        %v462 = vld [vmem:[%s441 + $0x50] sm:$0xf]
        %v463 = vld [vmem:[%s441 + $0x54] sm:$0xf]
        %v464 = vld [vmem:[%s441 + $0x58] sm:$0xf]
        %v465 = vld [vmem:[%s441 + $0x5c] sm:$0xf]
        %v466 = vld [vmem:[%s441 + $0x60] sm:$0xf]
        %v467 = vld [vmem:[%s441 + $0x64] sm:$0xf]
        %v468 = vld [vmem:[%s441 + $0x68] sm:$0xf]
        %v469 = vld [vmem:[%s441 + $0x6c] sm:$0xf]
        %v470 = vld [vmem:[%s441 + $0x70] sm:$0xf]
        %v471 = vld [vmem:[%s441 + $0x74] sm:$0xf]
        %v472 = vld [vmem:[%s441 + $0x78] sm:$0xf]
        %v473 = vld [vmem:[%s441 + $0x7c] sm:$0xf]
        %v506 = vunpack.c.l.b16 %v306
        %v507 = vunpack.c.h.b16 %v306
        %v508 = vunpack.c.l.b16 %v307
        %v509 = vunpack.c.h.b16 %v307
        %v510 = vunpack.c.l.b16 %v308
        %v511 = vunpack.c.h.b16 %v308
        %v512 = vunpack.c.l.b16 %v309
        %v513 = vunpack.c.h.b16 %v309
        %v514 = vunpack.c.l.b16 %v310
        %v515 = vunpack.c.h.b16 %v310
        %v516 = vunpack.c.l.b16 %v311
        %v517 = vunpack.c.h.b16 %v311
        %v518 = vunpack.c.l.b16 %v312
        %v519 = vunpack.c.h.b16 %v312
        %v520 = vunpack.c.l.b16 %v313
        %v521 = vunpack.c.h.b16 %v313
        %v522 = vunpack.c.l.b16 %v314
        %v523 = vunpack.c.h.b16 %v314
        %v524 = vunpack.c.l.b16 %v315
        %v525 = vunpack.c.h.b16 %v315
        %v526 = vunpack.c.l.b16 %v316
        %v527 = vunpack.c.h.b16 %v316
        %v528 = vunpack.c.l.b16 %v317
        %v529 = vunpack.c.h.b16 %v317
        %v530 = vunpack.c.l.b16 %v318
        %v531 = vunpack.c.h.b16 %v318
        %v532 = vunpack.c.l.b16 %v319
        %v533 = vunpack.c.h.b16 %v319
        %v534 = vunpack.c.l.b16 %v320
        %v535 = vunpack.c.h.b16 %v320
        %v536 = vunpack.c.l.b16 %v321
        %v537 = vunpack.c.h.b16 %v321
        %v538 = vunpack.c.l.b16 %v322
        %v539 = vunpack.c.h.b16 %v322
        %v540 = vunpack.c.l.b16 %v323
        %v541 = vunpack.c.h.b16 %v323
        %v542 = vunpack.c.l.b16 %v324
        %v543 = vunpack.c.h.b16 %v324
        %v544 = vunpack.c.l.b16 %v325
        %v545 = vunpack.c.h.b16 %v325
        %v546 = vunpack.c.l.b16 %v326
        %v547 = vunpack.c.h.b16 %v326
        %v548 = vunpack.c.l.b16 %v327
        %v549 = vunpack.c.h.b16 %v327
        %v550 = vunpack.c.l.b16 %v328
        %v551 = vunpack.c.h.b16 %v328
        %v552 = vunpack.c.l.b16 %v329
        %v553 = vunpack.c.h.b16 %v329
        %v554 = vunpack.c.l.b16 %v330
        %v555 = vunpack.c.h.b16 %v330
        %v556 = vunpack.c.l.b16 %v331
        %v557 = vunpack.c.h.b16 %v331
        %v558 = vunpack.c.l.b16 %v332
        %v559 = vunpack.c.h.b16 %v332
        %v560 = vunpack.c.l.b16 %v333
        %v561 = vunpack.c.h.b16 %v333
        %v562 = vunpack.c.l.b16 %v334
        %v563 = vunpack.c.h.b16 %v334
        %v564 = vunpack.c.l.b16 %v335
        %v565 = vunpack.c.h.b16 %v335
        %v566 = vunpack.c.l.b16 %v336
        %v567 = vunpack.c.h.b16 %v336
        %v568 = vunpack.c.l.b16 %v337
        %v569 = vunpack.c.h.b16 %v337
        %v570 = vpack.c.b16 %v508, %v506
        %v571 = vpack.c.b16 %v509, %v507
        %v572 = vpack.c.b16 %v512, %v510
        %v573 = vpack.c.b16 %v513, %v511
        %v574 = vpack.c.b16 %v516, %v514
        %v575 = vpack.c.b16 %v517, %v515
        %v576 = vpack.c.b16 %v520, %v518
        %v577 = vpack.c.b16 %v521, %v519
        %v578 = vpack.c.b16 %v524, %v522
        %v579 = vpack.c.b16 %v525, %v523
        %v580 = vpack.c.b16 %v528, %v526
        %v581 = vpack.c.b16 %v529, %v527
        %v582 = vpack.c.b16 %v532, %v530
        %v583 = vpack.c.b16 %v533, %v531
        %v584 = vpack.c.b16 %v536, %v534
        %v585 = vpack.c.b16 %v537, %v535
        %v586 = vpack.c.b16 %v540, %v538
        %v587 = vpack.c.b16 %v541, %v539
        %v588 = vpack.c.b16 %v544, %v542
        %v589 = vpack.c.b16 %v545, %v543
        %v590 = vpack.c.b16 %v548, %v546
        %v591 = vpack.c.b16 %v549, %v547
        %v592 = vpack.c.b16 %v552, %v550
        %v593 = vpack.c.b16 %v553, %v551
        %v594 = vpack.c.b16 %v556, %v554
        %v595 = vpack.c.b16 %v557, %v555
        %v596 = vpack.c.b16 %v560, %v558
        %v597 = vpack.c.b16 %v561, %v559
        %v598 = vpack.c.b16 %v564, %v562
        %v599 = vpack.c.b16 %v565, %v563
        %v600 = vpack.c.b16 %v568, %v566
        %v601 = vpack.c.b16 %v569, %v567
        %v666 = vunpack.c.l.b16 %v408
        %v667 = vunpack.c.l.b16 %v409
        %v668 = vunpack.c.l.b16 %v410
        %v669 = vunpack.c.l.b16 %v411
        %v670 = vunpack.c.l.b16 %v412
        %v671 = vunpack.c.l.b16 %v413
        %v672 = vunpack.c.l.b16 %v414
        %v673 = vunpack.c.l.b16 %v415
        %v674 = vunpack.c.l.b16 %v416
        %v675 = vunpack.c.l.b16 %v417
        %v676 = vunpack.c.l.b16 %v418
        %v677 = vunpack.c.l.b16 %v419
        %v678 = vunpack.c.l.b16 %v420
        %v679 = vunpack.c.l.b16 %v421
        %v680 = vunpack.c.l.b16 %v422
        %v681 = vunpack.c.l.b16 %v423
        %v682 = vunpack.c.l.b16 %v424
        %v683 = vunpack.c.l.b16 %v425
        %v684 = vunpack.c.l.b16 %v426
        %v685 = vunpack.c.l.b16 %v427
        %v686 = vunpack.c.l.b16 %v428
        %v687 = vunpack.c.l.b16 %v429
        %v688 = vunpack.c.l.b16 %v430
        %v689 = vunpack.c.l.b16 %v431
        %v690 = vunpack.c.l.b16 %v432
        %v691 = vunpack.c.l.b16 %v433
        %v692 = vunpack.c.l.b16 %v434
        %v693 = vunpack.c.l.b16 %v435
        %v694 = vunpack.c.l.b16 %v436
        %v695 = vunpack.c.l.b16 %v437
        %v696 = vunpack.c.l.b16 %v438
        %v697 = vunpack.c.l.b16 %v439
        %v698 = vpack.c.b16 %v667, %v666
        %v699 = vpack.c.b16 %v669, %v668
        %v700 = vpack.c.b16 %v671, %v670
        %v701 = vpack.c.b16 %v673, %v672
        %v702 = vpack.c.b16 %v675, %v674
        %v703 = vpack.c.b16 %v677, %v676
        %v704 = vpack.c.b16 %v679, %v678
        %v705 = vpack.c.b16 %v681, %v680
        %v706 = vpack.c.b16 %v683, %v682
        %v707 = vpack.c.b16 %v685, %v684
        %v708 = vpack.c.b16 %v687, %v686
        %v709 = vpack.c.b16 %v689, %v688
        %v710 = vpack.c.b16 %v691, %v690
        %v711 = vpack.c.b16 %v693, %v692
        %v712 = vpack.c.b16 %v695, %v694
        %v713 = vpack.c.b16 %v697, %v696
        %730 = vmatprep.subr.bf16.mxu0 0
        %731 = vmatpush1.bf16.msra.mxu0 %v698
        %732 = vmatprep.subr.bf16.mxu0 0
        %733 = vmatpush1.bf16.msra.mxu0 %v699
        %734 = vmatprep.subr.bf16.mxu0 0
        %735 = vmatpush1.bf16.msra.mxu0 %v700
        %736 = vmatprep.subr.bf16.mxu0 0
        %737 = vmatpush1.bf16.msra.mxu0 %v701
        %738 = vmatprep.subr.bf16.mxu0 0
        %739 = vmatpush1.bf16.msra.mxu0 %v702
        %740 = vmatprep.subr.bf16.mxu0 0
        %741 = vmatpush1.bf16.msra.mxu0 %v703
        %742 = vmatprep.subr.bf16.mxu0 0
        %743 = vmatpush1.bf16.msra.mxu0 %v704
        %744 = vmatprep.subr.bf16.mxu0 0
        %745 = vmatpush1.bf16.msra.mxu0 %v705
        %746 = vmatprep.subr.bf16.mxu0 0
        %747 = vmatpush1.bf16.msra.mxu0 %v706
        %748 = vmatprep.subr.bf16.mxu0 0
        %749 = vmatpush1.bf16.msra.mxu0 %v707
        %750 = vmatprep.subr.bf16.mxu0 0
        %751 = vmatpush1.bf16.msra.mxu0 %v708
        %752 = vmatprep.subr.bf16.mxu0 0
        %753 = vmatpush1.bf16.msra.mxu0 %v709
        %754 = vmatprep.subr.bf16.mxu0 0
        %755 = vmatpush1.bf16.msra.mxu0 %v710
        %756 = vmatprep.subr.bf16.mxu0 0
        %757 = vmatpush1.bf16.msra.mxu0 %v711
        %758 = vmatprep.subr.bf16.mxu0 0
        %759 = vmatpush1.bf16.msra.mxu0 %v712
        %760 = vmatprep.subr.bf16.mxu0 0
        %761 = vmatpush1.bf16.msra.mxu0 %v713
        %762 = vmatprep.mubr.bf16.mxu0 %v571
        %763 = vmatmul.mubr.bf16.gmra.mrb[0].mxu0 %v570
        %v764 = vpop.f32.mrb[0].mxu0
        %v765 = vadd.f32 0.0, %v764
        %v766 = vpop.f32.mrb[0].mxu0
        %v767 = vpop.f32.mrb[0].mxu0
        %v768 = vadd.f32 0.0, %v767
        %v769 = vpop.f32.mrb[0].mxu0
        %770 = vmatprep.mubr.bf16.mxu0 %v573
        %771 = vmatmul.mubr.bf16.gmra.mrb[0].mxu0 %v572
        %v772 = vpop.f32.mrb[0].mxu0
        %v773 = vadd.f32 0.0, %v772
        %v774 = vpop.f32.mrb[0].mxu0
        %v775 = vpop.f32.mrb[0].mxu0
        %v776 = vadd.f32 0.0, %v775
        %v777 = vpop.f32.mrb[0].mxu0
        %778 = vmatprep.mubr.bf16.mxu0 %v575
        %779 = vmatmul.mubr.bf16.gmra.mrb[0].mxu0 %v574
        %v780 = vpop.f32.mrb[0].mxu0
        %v781 = vadd.f32 0.0, %v780
        %v782 = vpop.f32.mrb[0].mxu0
        %v783 = vpop.f32.mrb[0].mxu0
        %v784 = vadd.f32 0.0, %v783
        %v785 = vpop.f32.mrb[0].mxu0
        %786 = vmatprep.mubr.bf16.mxu0 %v577
        %787 = vmatmul.mubr.bf16.gmra.mrb[0].mxu0 %v576
        %v788 = vpop.f32.mrb[0].mxu0
        %v789 = vadd.f32 0.0, %v788
        %v790 = vpop.f32.mrb[0].mxu0
        %v791 = vpop.f32.mrb[0].mxu0
        %v792 = vadd.f32 0.0, %v791
        %v793 = vpop.f32.mrb[0].mxu0
        %794 = vmatprep.mubr.bf16.mxu0 %v579
        %795 = vmatmul.mubr.bf16.gmra.mrb[0].mxu0 %v578
        %v796 = vpop.f32.mrb[0].mxu0
        %v797 = vadd.f32 0.0, %v796
        %v798 = vpop.f32.mrb[0].mxu0
        %v799 = vpop.f32.mrb[0].mxu0
        %v800 = vadd.f32 0.0, %v799
        %v801 = vpop.f32.mrb[0].mxu0
        %802 = vmatprep.mubr.bf16.mxu0 %v581
        %803 = vmatmul.mubr.bf16.gmra.mrb[0].mxu0 %v580
        %v804 = vpop.f32.mrb[0].mxu0
        %v805 = vadd.f32 0.0, %v804
        %v806 = vpop.f32.mrb[0].mxu0
        %v807 = vpop.f32.mrb[0].mxu0
        %v808 = vadd.f32 0.0, %v807
        %v809 = vpop.f32.mrb[0].mxu0
        %810 = vmatprep.mubr.bf16.mxu0 %v583
        %811 = vmatmul.mubr.bf16.gmra.mrb[0].mxu0 %v582
        %v812 = vpop.f32.mrb[0].mxu0
        %v813 = vadd.f32 0.0, %v812
        %v814 = vpop.f32.mrb[0].mxu0
        %v815 = vpop.f32.mrb[0].mxu0
        %v816 = vadd.f32 0.0, %v815
        %v817 = vpop.f32.mrb[0].mxu0
        %818 = vmatprep.mubr.bf16.mxu0 %v585
        %819 = vmatmul.mubr.bf16.gmra.mrb[0].mxu0 %v584
        %v820 = vpop.f32.mrb[0].mxu0
        %v821 = vadd.f32 0.0, %v820
        %v822 = vpop.f32.mrb[0].mxu0
        %v823 = vpop.f32.mrb[0].mxu0
        %v824 = vadd.f32 0.0, %v823
        %v825 = vpop.f32.mrb[0].mxu0
        %826 = vmatprep.mubr.bf16.mxu0 %v587
        %827 = vmatmul.mubr.bf16.gmra.mrb[0].mxu0 %v586
        %v828 = vpop.f32.mrb[0].mxu0
        %v829 = vadd.f32 0.0, %v828
        %v830 = vpop.f32.mrb[0].mxu0
        %v831 = vpop.f32.mrb[0].mxu0
        %v832 = vadd.f32 0.0, %v831
        %v833 = vpop.f32.mrb[0].mxu0
        %834 = vmatprep.mubr.bf16.mxu0 %v589
        %835 = vmatmul.mubr.bf16.gmra.mrb[0].mxu0 %v588
        %v836 = vpop.f32.mrb[0].mxu0
        %v837 = vadd.f32 0.0, %v836
        %v838 = vpop.f32.mrb[0].mxu0
        %v839 = vpop.f32.mrb[0].mxu0
        %v840 = vadd.f32 0.0, %v839
        %v841 = vpop.f32.mrb[0].mxu0
        %842 = vmatprep.mubr.bf16.mxu0 %v591
        %843 = vmatmul.mubr.bf16.gmra.mrb[0].mxu0 %v590
        %v844 = vpop.f32.mrb[0].mxu0
        %v845 = vadd.f32 0.0, %v844
        %v846 = vpop.f32.mrb[0].mxu0
        %v847 = vpop.f32.mrb[0].mxu0
        %v848 = vadd.f32 0.0, %v847
        %v849 = vpop.f32.mrb[0].mxu0
        %850 = vmatprep.mubr.bf16.mxu0 %v593
        %851 = vmatmul.mubr.bf16.gmra.mrb[0].mxu0 %v592
        %v852 = vpop.f32.mrb[0].mxu0
        %v853 = vadd.f32 0.0, %v852
        %v854 = vpop.f32.mrb[0].mxu0
        %v855 = vpop.f32.mrb[0].mxu0
        %v856 = vadd.f32 0.0, %v855
        %v857 = vpop.f32.mrb[0].mxu0
        %858 = vmatprep.mubr.bf16.mxu0 %v595
        %859 = vmatmul.mubr.bf16.gmra.mrb[0].mxu0 %v594
        %v860 = vpop.f32.mrb[0].mxu0
        %v861 = vadd.f32 0.0, %v860
        %v862 = vpop.f32.mrb[0].mxu0
        %v863 = vpop.f32.mrb[0].mxu0
        %v864 = vadd.f32 0.0, %v863
        %v865 = vpop.f32.mrb[0].mxu0
        %866 = vmatprep.mubr.bf16.mxu0 %v597
        %867 = vmatmul.mubr.bf16.gmra.mrb[0].mxu0 %v596
        %v868 = vpop.f32.mrb[0].mxu0
        %v869 = vadd.f32 0.0, %v868
        %v870 = vpop.f32.mrb[0].mxu0
        %v871 = vpop.f32.mrb[0].mxu0
        %v872 = vadd.f32 0.0, %v871
        %v873 = vpop.f32.mrb[0].mxu0
        %874 = vmatprep.mubr.bf16.mxu0 %v599
        %875 = vmatmul.mubr.bf16.gmra.mrb[0].mxu0 %v598
        %v876 = vpop.f32.mrb[0].mxu0
        %v877 = vadd.f32 0.0, %v876
        %v878 = vpop.f32.mrb[0].mxu0
        %v879 = vpop.f32.mrb[0].mxu0
        %v880 = vadd.f32 0.0, %v879
        %v881 = vpop.f32.mrb[0].mxu0
        %882 = vmatprep.mubr.bf16.mxu0 %v601
        %883 = vmatmul.mubr.bf16.gmra.mrb[0].mxu0 %v600
        %v884 = vpop.f32.mrb[0].mxu0
        %v885 = vadd.f32 0.0, %v884
        %v886 = vpop.f32.mrb[0].mxu0
        %v887 = vpop.f32.mrb[0].mxu0
        %v888 = vadd.f32 0.0, %v887
        %v889 = vpop.f32.mrb[0].mxu0
        %890 = vdwg.mxu0
        %892 = vset.pattern.permute.xlu0 0
        %893 = vperm.xlu0 %892, %v339
        %v894 = vpop.permute.xlu0 %893
        %897 = vset.pattern.permute.xlu0 0
        %898 = vperm.xlu0 %897, %v340
        %v899 = vpop.permute.xlu0 %898
        %902 = vset.pattern.permute.xlu0 0
        %903 = vperm.xlu0 %902, %v341
        %v904 = vpop.permute.xlu0 %903
        %907 = vset.pattern.permute.xlu0 0
        %908 = vperm.xlu0 %907, %v342
        %v909 = vpop.permute.xlu0 %908
        %912 = vset.pattern.permute.xlu0 0
        %913 = vperm.xlu0 %912, %v343
        %v914 = vpop.permute.xlu0 %913
        %917 = vset.pattern.permute.xlu0 0
        %918 = vperm.xlu0 %917, %v344
        %v919 = vpop.permute.xlu0 %918
        %922 = vset.pattern.permute.xlu0 0
        %923 = vperm.xlu0 %922, %v345
        %v924 = vpop.permute.xlu0 %923
        %927 = vset.pattern.permute.xlu0 0
        %928 = vperm.xlu0 %927, %v346
        %v929 = vpop.permute.xlu0 %928
        %932 = vset.pattern.permute.xlu0 0
        %933 = vperm.xlu0 %932, %v347
        %v934 = vpop.permute.xlu0 %933
        %937 = vset.pattern.permute.xlu0 0
        %938 = vperm.xlu0 %937, %v348
        %v939 = vpop.permute.xlu0 %938
        %942 = vset.pattern.permute.xlu0 0
        %943 = vperm.xlu0 %942, %v349
        %v944 = vpop.permute.xlu0 %943
        %947 = vset.pattern.permute.xlu0 0
        %948 = vperm.xlu0 %947, %v350
        %v949 = vpop.permute.xlu0 %948
        %952 = vset.pattern.permute.xlu0 0
        %953 = vperm.xlu0 %952, %v351
        %v954 = vpop.permute.xlu0 %953
        %957 = vset.pattern.permute.xlu0 0
        %958 = vperm.xlu0 %957, %v352
        %v959 = vpop.permute.xlu0 %958
        %962 = vset.pattern.permute.xlu0 0
        %963 = vperm.xlu0 %962, %v353
        %v964 = vpop.permute.xlu0 %963
        %967 = vset.pattern.permute.xlu0 0
        %968 = vperm.xlu0 %967, %v354
        %v969 = vpop.permute.xlu0 %968
        %972 = vset.pattern.permute.xlu0 0
        %973 = vperm.xlu0 %972, %v355
        %v974 = vpop.permute.xlu0 %973
        %977 = vset.pattern.permute.xlu0 0
        %978 = vperm.xlu0 %977, %v356
        %v979 = vpop.permute.xlu0 %978
        %982 = vset.pattern.permute.xlu0 0
        %983 = vperm.xlu0 %982, %v357
        %v984 = vpop.permute.xlu0 %983
        %987 = vset.pattern.permute.xlu0 0
        %988 = vperm.xlu0 %987, %v358
        %v989 = vpop.permute.xlu0 %988
        %992 = vset.pattern.permute.xlu0 0
        %993 = vperm.xlu0 %992, %v359
        %v994 = vpop.permute.xlu0 %993
        %997 = vset.pattern.permute.xlu0 0
        %998 = vperm.xlu0 %997, %v360
        %v999 = vpop.permute.xlu0 %998
        %1002 = vset.pattern.permute.xlu0 0
        %1003 = vperm.xlu0 %1002, %v361
        %v1004 = vpop.permute.xlu0 %1003
        %1007 = vset.pattern.permute.xlu0 0
        %1008 = vperm.xlu0 %1007, %v362
        %v1009 = vpop.permute.xlu0 %1008
        %1012 = vset.pattern.permute.xlu0 0
        %1013 = vperm.xlu0 %1012, %v363
        %v1014 = vpop.permute.xlu0 %1013
        %1017 = vset.pattern.permute.xlu0 0
        %1018 = vperm.xlu0 %1017, %v364
        %v1019 = vpop.permute.xlu0 %1018
        %1022 = vset.pattern.permute.xlu0 0
        %1023 = vperm.xlu0 %1022, %v365
        %v1024 = vpop.permute.xlu0 %1023
        %1027 = vset.pattern.permute.xlu0 0
        %1028 = vperm.xlu0 %1027, %v366
        %v1029 = vpop.permute.xlu0 %1028
        %1032 = vset.pattern.permute.xlu0 0
        %1033 = vperm.xlu0 %1032, %v367
        %v1034 = vpop.permute.xlu0 %1033
        %1037 = vset.pattern.permute.xlu0 0
        %1038 = vperm.xlu0 %1037, %v368
        %v1039 = vpop.permute.xlu0 %1038
        %1042 = vset.pattern.permute.xlu0 0
        %1043 = vperm.xlu0 %1042, %v369
        %v1044 = vpop.permute.xlu0 %1043
        %1047 = vset.pattern.permute.xlu0 0
        %1048 = vperm.xlu0 %1047, %v370
        %v1049 = vpop.permute.xlu0 %1048
        %v1051 = vmul.f32 %v765, %v894
        %v1052 = vmul.f32 %v768, %v899
        %v1053 = vmul.f32 %v773, %v904
        %v1054 = vmul.f32 %v776, %v909
        %v1055 = vmul.f32 %v781, %v914
        %v1056 = vmul.f32 %v784, %v919
        %v1057 = vmul.f32 %v789, %v924
        %v1058 = vmul.f32 %v792, %v929
        %v1059 = vmul.f32 %v797, %v934
        %v1060 = vmul.f32 %v800, %v939
        %v1061 = vmul.f32 %v805, %v944
        %v1062 = vmul.f32 %v808, %v949
        %v1063 = vmul.f32 %v813, %v954
        %v1064 = vmul.f32 %v816, %v959
        %v1065 = vmul.f32 %v821, %v964
        %v1066 = vmul.f32 %v824, %v969
        %v1067 = vmul.f32 %v829, %v974
        %v1068 = vmul.f32 %v832, %v979
        %v1069 = vmul.f32 %v837, %v984
        %v1070 = vmul.f32 %v840, %v989
        %v1071 = vmul.f32 %v845, %v994
        %v1072 = vmul.f32 %v848, %v999
        %v1073 = vmul.f32 %v853, %v1004
        %v1074 = vmul.f32 %v856, %v1009
        %v1075 = vmul.f32 %v861, %v1014
        %v1076 = vmul.f32 %v864, %v1019
        %v1077 = vmul.f32 %v869, %v1024
        %v1078 = vmul.f32 %v872, %v1029
        %v1079 = vmul.f32 %v877, %v1034
        %v1080 = vmul.f32 %v880, %v1039
        %v1081 = vmul.f32 %v885, %v1044
        %v1082 = vmul.f32 %v888, %v1049
        %v1083 = vpack.c.bf16 %v1052, %v1051
        %v1084 = vpack.c.bf16 %v1054, %v1053
        %v1085 = vpack.c.bf16 %v1056, %v1055
        %v1086 = vpack.c.bf16 %v1058, %v1057
        %v1087 = vpack.c.bf16 %v1060, %v1059
        %v1088 = vpack.c.bf16 %v1062, %v1061
        %v1089 = vpack.c.bf16 %v1064, %v1063
        %v1090 = vpack.c.bf16 %v1066, %v1065
        %v1091 = vpack.c.bf16 %v1068, %v1067
        %v1092 = vpack.c.bf16 %v1070, %v1069
        %v1093 = vpack.c.bf16 %v1072, %v1071
        %v1094 = vpack.c.bf16 %v1074, %v1073
        %v1095 = vpack.c.bf16 %v1076, %v1075
        %v1096 = vpack.c.bf16 %v1078, %v1077
        %v1097 = vpack.c.bf16 %v1080, %v1079
        %v1098 = vpack.c.bf16 %v1082, %v1081
        %v1131 = vunpack.c.l.b16 %v442
        %v1132 = vunpack.c.l.b16 %v443
        %v1133 = vunpack.c.l.b16 %v444
        %v1134 = vunpack.c.l.b16 %v445
        %v1135 = vunpack.c.l.b16 %v446
        %v1136 = vunpack.c.l.b16 %v447
        %v1137 = vunpack.c.l.b16 %v448
        %v1138 = vunpack.c.l.b16 %v449
        %v1139 = vunpack.c.l.b16 %v450
        %v1140 = vunpack.c.l.b16 %v451
        %v1141 = vunpack.c.l.b16 %v452
        %v1142 = vunpack.c.l.b16 %v453
        %v1143 = vunpack.c.l.b16 %v454
        %v1144 = vunpack.c.l.b16 %v455
        %v1145 = vunpack.c.l.b16 %v456
        %v1146 = vunpack.c.l.b16 %v457
        %v1147 = vunpack.c.l.b16 %v458
        %v1148 = vunpack.c.l.b16 %v459
        %v1149 = vunpack.c.l.b16 %v460
        %v1150 = vunpack.c.l.b16 %v461
        %v1151 = vunpack.c.l.b16 %v462
        %v1152 = vunpack.c.l.b16 %v463
        %v1153 = vunpack.c.l.b16 %v464
        %v1154 = vunpack.c.l.b16 %v465
        %v1155 = vunpack.c.l.b16 %v466
        %v1156 = vunpack.c.l.b16 %v467
        %v1157 = vunpack.c.l.b16 %v468
        %v1158 = vunpack.c.l.b16 %v469
        %v1159 = vunpack.c.l.b16 %v470
        %v1160 = vunpack.c.l.b16 %v471
        %v1161 = vunpack.c.l.b16 %v472
        %v1162 = vunpack.c.l.b16 %v473
        %v1163 = vpack.c.b16 %v1132, %v1131
        %v1164 = vpack.c.b16 %v1134, %v1133
        %v1165 = vpack.c.b16 %v1136, %v1135
        %v1166 = vpack.c.b16 %v1138, %v1137
        %v1167 = vpack.c.b16 %v1140, %v1139
        %v1168 = vpack.c.b16 %v1142, %v1141
        %v1169 = vpack.c.b16 %v1144, %v1143
        %v1170 = vpack.c.b16 %v1146, %v1145
        %v1171 = vpack.c.b16 %v1148, %v1147
        %v1172 = vpack.c.b16 %v1150, %v1149
        %v1173 = vpack.c.b16 %v1152, %v1151
        %v1174 = vpack.c.b16 %v1154, %v1153
        %v1175 = vpack.c.b16 %v1156, %v1155
        %v1176 = vpack.c.b16 %v1158, %v1157
        %v1177 = vpack.c.b16 %v1160, %v1159
        %v1178 = vpack.c.b16 %v1162, %v1161
        %v1211 = vunpack.c.l.b16 %v387
        %v1212 = vunpack.c.l.b16 %v388
        %v1213 = vunpack.c.l.b16 %v389
        %v1214 = vunpack.c.l.b16 %v390
        %v1215 = vunpack.c.l.b16 %v391
        %v1216 = vunpack.c.l.b16 %v392
        %v1217 = vunpack.c.l.b16 %v393
        %v1218 = vunpack.c.l.b16 %v394
        %v1219 = vunpack.c.l.b16 %v395
        %v1220 = vunpack.c.l.b16 %v396
        %v1221 = vunpack.c.l.b16 %v397
        %v1222 = vunpack.c.l.b16 %v398
        %v1223 = vunpack.c.l.b16 %v399
        %v1224 = vunpack.c.l.b16 %v400
        %v1225 = vunpack.c.l.b16 %v401
        %v1226 = vunpack.c.l.b16 %v402
        %v1227 = vpack.c.b16 %v1212, %v1211
        %v1228 = vpack.c.b16 %v1214, %v1213
        %v1229 = vpack.c.b16 %v1216, %v1215
        %v1230 = vpack.c.b16 %v1218, %v1217
        %v1231 = vpack.c.b16 %v1220, %v1219
        %v1232 = vpack.c.b16 %v1222, %v1221
        %v1233 = vpack.c.b16 %v1224, %v1223
        %v1234 = vpack.c.b16 %v1226, %v1225
        %1243 = vmatprep.subr.bf16.mxu0 0
        %1244 = vmatpush1.bf16.msra.mxu0 %v1227
        %1245 = vmatprep.subr.bf16.mxu0 0
        %1246 = vmatpush1.bf16.msra.mxu0 %v1228
        %1247 = vmatprep.subr.bf16.mxu0 0
        %1248 = vmatpush1.bf16.msra.mxu0 %v1229
        %1249 = vmatprep.subr.bf16.mxu0 0
        %1250 = vmatpush1.bf16.msra.mxu0 %v1230
        %1251 = vmatprep.subr.bf16.mxu0 0
        %1252 = vmatpush1.bf16.msra.mxu0 %v1231
        %1253 = vmatprep.subr.bf16.mxu0 0
        %1254 = vmatpush1.bf16.msra.mxu0 %v1232
        %1255 = vmatprep.subr.bf16.mxu0 0
        %1256 = vmatpush1.bf16.msra.mxu0 %v1233
        %1257 = vmatprep.subr.bf16.mxu0 0
        %1258 = vmatpush1.bf16.msra.mxu0 %v1234
        %1259 = vmatprep.subr.bf16.mxu0 0
        %1260 = vmatpush1.bf16.msra.mxu0 0
        %1261 = vmatprep.subr.bf16.mxu0 0
        %1262 = vmatpush1.bf16.msra.mxu0 0
        %1263 = vmatprep.subr.bf16.mxu0 0
        %1264 = vmatpush1.bf16.msra.mxu0 0
        %1265 = vmatprep.subr.bf16.mxu0 0
        %1266 = vmatpush1.bf16.msra.mxu0 0
        %1267 = vmatprep.subr.bf16.mxu0 0
        %1268 = vmatpush1.bf16.msra.mxu0 0
        %1269 = vmatprep.subr.bf16.mxu0 0
        %1270 = vmatpush1.bf16.msra.mxu0 0
        %1271 = vmatprep.subr.bf16.mxu0 0
        %1272 = vmatpush1.bf16.msra.mxu0 0
        %1273 = vmatprep.subr.bf16.mxu0 0
        %1274 = vmatpush1.bf16.msra.mxu0 0
        %1275 = vmatprep.mubr.bf16.mxu0 0
        %1276 = vmatmul.mubr.bf16.gmra.mrb[0].mxu0 %v1163
        %v1277 = vpop.f32.mrb[0].mxu0
        %v1278 = vadd.f32 0.0, %v1277
        %v1279 = vpop.f32.mrb[0].mxu0
        %v1280 = vpop.f32.mrb[0].mxu0
        %v1281 = vadd.f32 0.0, %v1280
        %v1282 = vpop.f32.mrb[0].mxu0
        %1283 = vmatprep.mubr.bf16.mxu0 0
        %1284 = vmatmul.mubr.bf16.gmra.mrb[0].mxu0 %v1164
        %v1285 = vpop.f32.mrb[0].mxu0
        %v1286 = vadd.f32 0.0, %v1285
        %v1287 = vpop.f32.mrb[0].mxu0
        %v1288 = vpop.f32.mrb[0].mxu0
        %v1289 = vadd.f32 0.0, %v1288
        %v1290 = vpop.f32.mrb[0].mxu0
        %1291 = vmatprep.mubr.bf16.mxu0 0
        %1292 = vmatmul.mubr.bf16.gmra.mrb[0].mxu0 %v1165
        %v1293 = vpop.f32.mrb[0].mxu0
        %v1294 = vadd.f32 0.0, %v1293
        %v1295 = vpop.f32.mrb[0].mxu0
        %v1296 = vpop.f32.mrb[0].mxu0
        %v1297 = vadd.f32 0.0, %v1296
        %v1298 = vpop.f32.mrb[0].mxu0
        %1299 = vmatprep.mubr.bf16.mxu0 0
        %1300 = vmatmul.mubr.bf16.gmra.mrb[0].mxu0 %v1166
        %v1301 = vpop.f32.mrb[0].mxu0
        %v1302 = vadd.f32 0.0, %v1301
        %v1303 = vpop.f32.mrb[0].mxu0
        %v1304 = vpop.f32.mrb[0].mxu0
        %v1305 = vadd.f32 0.0, %v1304
        %v1306 = vpop.f32.mrb[0].mxu0
        %1307 = vmatprep.mubr.bf16.mxu0 0
        %1308 = vmatmul.mubr.bf16.gmra.mrb[0].mxu0 %v1167
        %v1309 = vpop.f32.mrb[0].mxu0
        %v1310 = vadd.f32 0.0, %v1309
        %v1311 = vpop.f32.mrb[0].mxu0
        %v1312 = vpop.f32.mrb[0].mxu0
        %v1313 = vadd.f32 0.0, %v1312
        %v1314 = vpop.f32.mrb[0].mxu0
        %1315 = vmatprep.mubr.bf16.mxu0 0
        %1316 = vmatmul.mubr.bf16.gmra.mrb[0].mxu0 %v1168
        %v1317 = vpop.f32.mrb[0].mxu0
        %v1318 = vadd.f32 0.0, %v1317
        %v1319 = vpop.f32.mrb[0].mxu0
        %v1320 = vpop.f32.mrb[0].mxu0
        %v1321 = vadd.f32 0.0, %v1320
        %v1322 = vpop.f32.mrb[0].mxu0
        %1323 = vmatprep.mubr.bf16.mxu0 0
        %1324 = vmatmul.mubr.bf16.gmra.mrb[0].mxu0 %v1169
        %v1325 = vpop.f32.mrb[0].mxu0
        %v1326 = vadd.f32 0.0, %v1325
        %v1327 = vpop.f32.mrb[0].mxu0
        %v1328 = vpop.f32.mrb[0].mxu0
        %v1329 = vadd.f32 0.0, %v1328
        %v1330 = vpop.f32.mrb[0].mxu0
        %1331 = vmatprep.mubr.bf16.mxu0 0
        %1332 = vmatmul.mubr.bf16.gmra.mrb[0].mxu0 %v1170
        %v1333 = vpop.f32.mrb[0].mxu0
        %v1334 = vadd.f32 0.0, %v1333
        %v1335 = vpop.f32.mrb[0].mxu0
        %v1336 = vpop.f32.mrb[0].mxu0
        %v1337 = vadd.f32 0.0, %v1336
        %v1338 = vpop.f32.mrb[0].mxu0
        %1339 = vmatprep.mubr.bf16.mxu0 0
        %1340 = vmatmul.mubr.bf16.gmra.mrb[0].mxu0 %v1171
        %v1341 = vpop.f32.mrb[0].mxu0
        %v1342 = vadd.f32 0.0, %v1341
        %v1343 = vpop.f32.mrb[0].mxu0
        %v1344 = vpop.f32.mrb[0].mxu0
        %v1345 = vadd.f32 0.0, %v1344
        %v1346 = vpop.f32.mrb[0].mxu0
        %1347 = vmatprep.mubr.bf16.mxu0 0
        %1348 = vmatmul.mubr.bf16.gmra.mrb[0].mxu0 %v1172
        %v1349 = vpop.f32.mrb[0].mxu0
        %v1350 = vadd.f32 0.0, %v1349
        %v1351 = vpop.f32.mrb[0].mxu0
        %v1352 = vpop.f32.mrb[0].mxu0
        %v1353 = vadd.f32 0.0, %v1352
        %v1354 = vpop.f32.mrb[0].mxu0
        %1355 = vmatprep.mubr.bf16.mxu0 0
        %1356 = vmatmul.mubr.bf16.gmra.mrb[0].mxu0 %v1173
        %v1357 = vpop.f32.mrb[0].mxu0
        %v1358 = vadd.f32 0.0, %v1357
        %v1359 = vpop.f32.mrb[0].mxu0
        %v1360 = vpop.f32.mrb[0].mxu0
        %v1361 = vadd.f32 0.0, %v1360
        %v1362 = vpop.f32.mrb[0].mxu0
        %1363 = vmatprep.mubr.bf16.mxu0 0
        %1364 = vmatmul.mubr.bf16.gmra.mrb[0].mxu0 %v1174
        %v1365 = vpop.f32.mrb[0].mxu0
        %v1366 = vadd.f32 0.0, %v1365
        %v1367 = vpop.f32.mrb[0].mxu0
        %v1368 = vpop.f32.mrb[0].mxu0
        %v1369 = vadd.f32 0.0, %v1368
        %v1370 = vpop.f32.mrb[0].mxu0
        %1371 = vmatprep.mubr.bf16.mxu0 0
        %1372 = vmatmul.mubr.bf16.gmra.mrb[0].mxu0 %v1175
        %v1373 = vpop.f32.mrb[0].mxu0
        %v1374 = vadd.f32 0.0, %v1373
        %v1375 = vpop.f32.mrb[0].mxu0
        %v1376 = vpop.f32.mrb[0].mxu0
        %v1377 = vadd.f32 0.0, %v1376
        %v1378 = vpop.f32.mrb[0].mxu0
        %1379 = vmatprep.mubr.bf16.mxu0 0
        %1380 = vmatmul.mubr.bf16.gmra.mrb[0].mxu0 %v1176
        %v1381 = vpop.f32.mrb[0].mxu0
        %v1382 = vadd.f32 0.0, %v1381
        %v1383 = vpop.f32.mrb[0].mxu0
        %v1384 = vpop.f32.mrb[0].mxu0
        %v1385 = vadd.f32 0.0, %v1384
        %v1386 = vpop.f32.mrb[0].mxu0
        %1387 = vmatprep.mubr.bf16.mxu0 0
        %1388 = vmatmul.mubr.bf16.gmra.mrb[0].mxu0 %v1177
        %v1389 = vpop.f32.mrb[0].mxu0
        %v1390 = vadd.f32 0.0, %v1389
        %v1391 = vpop.f32.mrb[0].mxu0
        %v1392 = vpop.f32.mrb[0].mxu0
        %v1393 = vadd.f32 0.0, %v1392
        %v1394 = vpop.f32.mrb[0].mxu0
        %1395 = vmatprep.mubr.bf16.mxu0 0
        %1396 = vmatmul.mubr.bf16.gmra.mrb[0].mxu0 %v1178
        %v1397 = vpop.f32.mrb[0].mxu0
        %v1398 = vadd.f32 0.0, %v1397
        %v1399 = vpop.f32.mrb[0].mxu0
        %v1400 = vpop.f32.mrb[0].mxu0
        %v1401 = vadd.f32 0.0, %v1400
        %v1402 = vpop.f32.mrb[0].mxu0
        %1403 = vdwg.mxu0
        %v1420 = vunpack.c.l.b16 %v371
        %v1421 = vunpack.c.l.b16 %v372
        %v1422 = vunpack.c.l.b16 %v373
        %v1423 = vunpack.c.l.b16 %v374
        %v1424 = vunpack.c.l.b16 %v375
        %v1425 = vunpack.c.l.b16 %v376
        %v1426 = vunpack.c.l.b16 %v377
        %v1427 = vunpack.c.l.b16 %v378
        %v1428 = vunpack.c.l.b16 %v379
        %v1429 = vunpack.c.l.b16 %v380
        %v1430 = vunpack.c.l.b16 %v381
        %v1431 = vunpack.c.l.b16 %v382
        %v1432 = vunpack.c.l.b16 %v383
        %v1433 = vunpack.c.l.b16 %v384
        %v1434 = vunpack.c.l.b16 %v385
        %v1435 = vunpack.c.l.b16 %v386
        %v1436 = vpack.c.b16 %v1421, %v1420
        %v1437 = vpack.c.b16 %v1423, %v1422
        %v1438 = vpack.c.b16 %v1425, %v1424
        %v1439 = vpack.c.b16 %v1427, %v1426
        %v1440 = vpack.c.b16 %v1429, %v1428
        %v1441 = vpack.c.b16 %v1431, %v1430
        %v1442 = vpack.c.b16 %v1433, %v1432
        %v1443 = vpack.c.b16 %v1435, %v1434
        %1452 = vmatprep.subr.bf16.mxu0 0
        %1453 = vmatpush1.bf16.msra.mxu0 %v1436
        %1454 = vmatprep.subr.bf16.mxu0 0
        %1455 = vmatpush1.bf16.msra.mxu0 %v1437
        %1456 = vmatprep.subr.bf16.mxu0 0
        %1457 = vmatpush1.bf16.msra.mxu0 %v1438
        %1458 = vmatprep.subr.bf16.mxu0 0
        %1459 = vmatpush1.bf16.msra.mxu0 %v1439
        %1460 = vmatprep.subr.bf16.mxu0 0
        %1461 = vmatpush1.bf16.msra.mxu0 %v1440
        %1462 = vmatprep.subr.bf16.mxu0 0
        %1463 = vmatpush1.bf16.msra.mxu0 %v1441
        %1464 = vmatprep.subr.bf16.mxu0 0
        %1465 = vmatpush1.bf16.msra.mxu0 %v1442
        %1466 = vmatprep.subr.bf16.mxu0 0
        %1467 = vmatpush1.bf16.msra.mxu0 %v1443
        %1468 = vmatprep.subr.bf16.mxu0 0
        %1469 = vmatpush1.bf16.msra.mxu0 0
        %1470 = vmatprep.subr.bf16.mxu0 0
        %1471 = vmatpush1.bf16.msra.mxu0 0
        %1472 = vmatprep.subr.bf16.mxu0 0
        %1473 = vmatpush1.bf16.msra.mxu0 0
        %1474 = vmatprep.subr.bf16.mxu0 0
        %1475 = vmatpush1.bf16.msra.mxu0 0
        %1476 = vmatprep.subr.bf16.mxu0 0
        %1477 = vmatpush1.bf16.msra.mxu0 0
        %1478 = vmatprep.subr.bf16.mxu0 0
        %1479 = vmatpush1.bf16.msra.mxu0 0
        %1480 = vmatprep.subr.bf16.mxu0 0
        %1481 = vmatpush1.bf16.msra.mxu0 0
        %1482 = vmatprep.subr.bf16.mxu0 0
        %1483 = vmatpush1.bf16.msra.mxu0 0
        %1484 = vmatprep.mubr.bf16.mxu0 0
        %1485 = vmatmul.mubr.bf16.gmra.mrb[0].mxu0 %v1083
        %v1486 = vpop.f32.mrb[0].mxu0
        %v1487 = vadd.f32 %v1278, %v1486
        %v1488 = vpop.f32.mrb[0].mxu0
        %v1489 = vpop.f32.mrb[0].mxu0
        %v1490 = vadd.f32 %v1281, %v1489
        %v1491 = vpop.f32.mrb[0].mxu0
        %1492 = vmatprep.mubr.bf16.mxu0 0
        %1493 = vmatmul.mubr.bf16.gmra.mrb[0].mxu0 %v1084
        %v1494 = vpop.f32.mrb[0].mxu0
        %v1495 = vadd.f32 %v1286, %v1494
        %v1496 = vpop.f32.mrb[0].mxu0
        %v1497 = vpop.f32.mrb[0].mxu0
        %v1498 = vadd.f32 %v1289, %v1497
        %v1499 = vpop.f32.mrb[0].mxu0
        %1500 = vmatprep.mubr.bf16.mxu0 0
        %1501 = vmatmul.mubr.bf16.gmra.mrb[0].mxu0 %v1085
        %v1502 = vpop.f32.mrb[0].mxu0
        %v1503 = vadd.f32 %v1294, %v1502
        %v1504 = vpop.f32.mrb[0].mxu0
        %v1505 = vpop.f32.mrb[0].mxu0
        %v1506 = vadd.f32 %v1297, %v1505
        %v1507 = vpop.f32.mrb[0].mxu0
        %1508 = vmatprep.mubr.bf16.mxu0 0
        %1509 = vmatmul.mubr.bf16.gmra.mrb[0].mxu0 %v1086
        %v1510 = vpop.f32.mrb[0].mxu0
        %v1511 = vadd.f32 %v1302, %v1510
        %v1512 = vpop.f32.mrb[0].mxu0
        %v1513 = vpop.f32.mrb[0].mxu0
        %v1514 = vadd.f32 %v1305, %v1513
        %v1515 = vpop.f32.mrb[0].mxu0
        %1516 = vmatprep.mubr.bf16.mxu0 0
        %1517 = vmatmul.mubr.bf16.gmra.mrb[0].mxu0 %v1087
        %v1518 = vpop.f32.mrb[0].mxu0
        %v1519 = vadd.f32 %v1310, %v1518
        %v1520 = vpop.f32.mrb[0].mxu0
        %v1521 = vpop.f32.mrb[0].mxu0
        %v1522 = vadd.f32 %v1313, %v1521
        %v1523 = vpop.f32.mrb[0].mxu0
        %1524 = vmatprep.mubr.bf16.mxu0 0
        %1525 = vmatmul.mubr.bf16.gmra.mrb[0].mxu0 %v1088
        %v1526 = vpop.f32.mrb[0].mxu0
        %v1527 = vadd.f32 %v1318, %v1526
        %v1528 = vpop.f32.mrb[0].mxu0
        %v1529 = vpop.f32.mrb[0].mxu0
        %v1530 = vadd.f32 %v1321, %v1529
        %v1531 = vpop.f32.mrb[0].mxu0
        %1532 = vmatprep.mubr.bf16.mxu0 0
        %1533 = vmatmul.mubr.bf16.gmra.mrb[0].mxu0 %v1089
        %v1534 = vpop.f32.mrb[0].mxu0
        %v1535 = vadd.f32 %v1326, %v1534
        %v1536 = vpop.f32.mrb[0].mxu0
        %v1537 = vpop.f32.mrb[0].mxu0
        %v1538 = vadd.f32 %v1329, %v1537
        %v1539 = vpop.f32.mrb[0].mxu0
        %1540 = vmatprep.mubr.bf16.mxu0 0
        %1541 = vmatmul.mubr.bf16.gmra.mrb[0].mxu0 %v1090
        %v1542 = vpop.f32.mrb[0].mxu0
        %v1543 = vadd.f32 %v1334, %v1542
        %v1544 = vpop.f32.mrb[0].mxu0
        %v1545 = vpop.f32.mrb[0].mxu0
        %v1546 = vadd.f32 %v1337, %v1545
        %v1547 = vpop.f32.mrb[0].mxu0
        %1548 = vmatprep.mubr.bf16.mxu0 0
        %1549 = vmatmul.mubr.bf16.gmra.mrb[0].mxu0 %v1091
        %v1550 = vpop.f32.mrb[0].mxu0
        %v1551 = vadd.f32 %v1342, %v1550
        %v1552 = vpop.f32.mrb[0].mxu0
        %v1553 = vpop.f32.mrb[0].mxu0
        %v1554 = vadd.f32 %v1345, %v1553
        %v1555 = vpop.f32.mrb[0].mxu0
        %1556 = vmatprep.mubr.bf16.mxu0 0
        %1557 = vmatmul.mubr.bf16.gmra.mrb[0].mxu0 %v1092
        %v1558 = vpop.f32.mrb[0].mxu0
        %v1559 = vadd.f32 %v1350, %v1558
        %v1560 = vpop.f32.mrb[0].mxu0
        %v1561 = vpop.f32.mrb[0].mxu0
        %v1562 = vadd.f32 %v1353, %v1561
        %v1563 = vpop.f32.mrb[0].mxu0
        %1564 = vmatprep.mubr.bf16.mxu0 0
        %1565 = vmatmul.mubr.bf16.gmra.mrb[0].mxu0 %v1093
        %v1566 = vpop.f32.mrb[0].mxu0
        %v1567 = vadd.f32 %v1358, %v1566
        %v1568 = vpop.f32.mrb[0].mxu0
        %v1569 = vpop.f32.mrb[0].mxu0
        %v1570 = vadd.f32 %v1361, %v1569
        %v1571 = vpop.f32.mrb[0].mxu0
        %1572 = vmatprep.mubr.bf16.mxu0 0
        %1573 = vmatmul.mubr.bf16.gmra.mrb[0].mxu0 %v1094
        %v1574 = vpop.f32.mrb[0].mxu0
        %v1575 = vadd.f32 %v1366, %v1574
        %v1576 = vpop.f32.mrb[0].mxu0
        %v1577 = vpop.f32.mrb[0].mxu0
        %v1578 = vadd.f32 %v1369, %v1577
        %v1579 = vpop.f32.mrb[0].mxu0
        %1580 = vmatprep.mubr.bf16.mxu0 0
        %1581 = vmatmul.mubr.bf16.gmra.mrb[0].mxu0 %v1095
        %v1582 = vpop.f32.mrb[0].mxu0
        %v1583 = vadd.f32 %v1374, %v1582
        %v1584 = vpop.f32.mrb[0].mxu0
        %v1585 = vpop.f32.mrb[0].mxu0
        %v1586 = vadd.f32 %v1377, %v1585
        %v1587 = vpop.f32.mrb[0].mxu0
        %1588 = vmatprep.mubr.bf16.mxu0 0
        %1589 = vmatmul.mubr.bf16.gmra.mrb[0].mxu0 %v1096
        %v1590 = vpop.f32.mrb[0].mxu0
        %v1591 = vadd.f32 %v1382, %v1590
        %v1592 = vpop.f32.mrb[0].mxu0
        %v1593 = vpop.f32.mrb[0].mxu0
        %v1594 = vadd.f32 %v1385, %v1593
        %v1595 = vpop.f32.mrb[0].mxu0
        %1596 = vmatprep.mubr.bf16.mxu0 0
        %1597 = vmatmul.mubr.bf16.gmra.mrb[0].mxu0 %v1097
        %v1598 = vpop.f32.mrb[0].mxu0
        %v1599 = vadd.f32 %v1390, %v1598
        %v1600 = vpop.f32.mrb[0].mxu0
        %v1601 = vpop.f32.mrb[0].mxu0
        %v1602 = vadd.f32 %v1393, %v1601
        %v1603 = vpop.f32.mrb[0].mxu0
        %1604 = vmatprep.mubr.bf16.mxu0 0
        %1605 = vmatmul.mubr.bf16.gmra.mrb[0].mxu0 %v1098
        %v1606 = vpop.f32.mrb[0].mxu0
        %v1607 = vadd.f32 %v1398, %v1606
        %v1608 = vpop.f32.mrb[0].mxu0
        %v1609 = vpop.f32.mrb[0].mxu0
        %v1610 = vadd.f32 %v1401, %v1609
        %v1611 = vpop.f32.mrb[0].mxu0
        %1612 = vdwg.mxu0
        %v1614 = vlaneseq
        %v1615 = vshrl.u32 %v1614, 7
        %v1616 = vsub.s32 0, %v1615
        %v1617 = vrot.slane %v403, %v1616
        %v1619 = vadd.f32 %v1487, %v1617
        %v1620 = vadd.f32 %v1490, %v1617
        %v1621 = vadd.f32 %v1495, %v1617
        %v1622 = vadd.f32 %v1498, %v1617
        %v1623 = vadd.f32 %v1503, %v1617
        %v1624 = vadd.f32 %v1506, %v1617
        %v1625 = vadd.f32 %v1511, %v1617
        %v1626 = vadd.f32 %v1514, %v1617
        %v1627 = vadd.f32 %v1519, %v1617
        %v1628 = vadd.f32 %v1522, %v1617
        %v1629 = vadd.f32 %v1527, %v1617
        %v1630 = vadd.f32 %v1530, %v1617
        %v1631 = vadd.f32 %v1535, %v1617
        %v1632 = vadd.f32 %v1538, %v1617
        %v1633 = vadd.f32 %v1543, %v1617
        %v1634 = vadd.f32 %v1546, %v1617
        %v1635 = vadd.f32 %v1551, %v1617
        %v1636 = vadd.f32 %v1554, %v1617
        %v1637 = vadd.f32 %v1559, %v1617
        %v1638 = vadd.f32 %v1562, %v1617
        %v1639 = vadd.f32 %v1567, %v1617
        %v1640 = vadd.f32 %v1570, %v1617
        %v1641 = vadd.f32 %v1575, %v1617
        %v1642 = vadd.f32 %v1578, %v1617
        %v1643 = vadd.f32 %v1583, %v1617
        %v1644 = vadd.f32 %v1586, %v1617
        %v1645 = vadd.f32 %v1591, %v1617
        %v1646 = vadd.f32 %v1594, %v1617
        %v1647 = vadd.f32 %v1599, %v1617
        %v1648 = vadd.f32 %v1602, %v1617
        %v1649 = vadd.f32 %v1607, %v1617
        %v1650 = vadd.f32 %v1610, %v1617
        %v1651 = vmax.f32 %v1619, 0.0
        %v1652 = vmax.f32 %v1620, 0.0
        %v1653 = vmax.f32 %v1621, 0.0
        %v1654 = vmax.f32 %v1622, 0.0
        %v1655 = vmax.f32 %v1623, 0.0
        %v1656 = vmax.f32 %v1624, 0.0
        %v1657 = vmax.f32 %v1625, 0.0
        %v1658 = vmax.f32 %v1626, 0.0
        %v1659 = vmax.f32 %v1627, 0.0
        %v1660 = vmax.f32 %v1628, 0.0
        %v1661 = vmax.f32 %v1629, 0.0
        %v1662 = vmax.f32 %v1630, 0.0
        %v1663 = vmax.f32 %v1631, 0.0
        %v1664 = vmax.f32 %v1632, 0.0
        %v1665 = vmax.f32 %v1633, 0.0
        %v1666 = vmax.f32 %v1634, 0.0
        %v1667 = vmax.f32 %v1635, 0.0
        %v1668 = vmax.f32 %v1636, 0.0
        %v1669 = vmax.f32 %v1637, 0.0
        %v1670 = vmax.f32 %v1638, 0.0
        %v1671 = vmax.f32 %v1639, 0.0
        %v1672 = vmax.f32 %v1640, 0.0
        %v1673 = vmax.f32 %v1641, 0.0
        %v1674 = vmax.f32 %v1642, 0.0
        %v1675 = vmax.f32 %v1643, 0.0
        %v1676 = vmax.f32 %v1644, 0.0
        %v1677 = vmax.f32 %v1645, 0.0
        %v1678 = vmax.f32 %v1646, 0.0
        %v1679 = vmax.f32 %v1647, 0.0
        %v1680 = vmax.f32 %v1648, 0.0
        %v1681 = vmax.f32 %v1649, 0.0
        %v1682 = vmax.f32 %v1650, 0.0
        %v1683 = vpack.c.bf16 %v1652, %v1651
        %v1684 = vpack.c.bf16 %v1654, %v1653
        %v1685 = vpack.c.bf16 %v1656, %v1655
        %v1686 = vpack.c.bf16 %v1658, %v1657
        %v1687 = vpack.c.bf16 %v1660, %v1659
        %v1688 = vpack.c.bf16 %v1662, %v1661
        %v1689 = vpack.c.bf16 %v1664, %v1663
        %v1690 = vpack.c.bf16 %v1666, %v1665
        %v1691 = vpack.c.bf16 %v1668, %v1667
        %v1692 = vpack.c.bf16 %v1670, %v1669
        %v1693 = vpack.c.bf16 %v1672, %v1671
        %v1694 = vpack.c.bf16 %v1674, %v1673
        %v1695 = vpack.c.bf16 %v1676, %v1675
        %v1696 = vpack.c.bf16 %v1678, %v1677
        %v1697 = vpack.c.bf16 %v1680, %v1679
        %v1698 = vpack.c.bf16 %v1682, %v1681
        %s1699 = sshra.s32 %s300, 4
        %s1700 = sand.u32 %s300, 15
        %s1701 = smul.addr %s1699, 8
        %s1702 = scalar_lea.vmem [#allocation2], %s1701
        %1703 = vst [vmem:[%s1702] sm:$0xff] %v1683
        %1704 = vst [vmem:[%s1702 + $0x8] sm:$0xff] %v1684
        %1705 = vst [vmem:[%s1702 + $0x10] sm:$0xff] %v1685
        %1706 = vst [vmem:[%s1702 + $0x18] sm:$0xff] %v1686
        %1707 = vst [vmem:[%s1702 + $0x20] sm:$0xff] %v1687
        %1708 = vst [vmem:[%s1702 + $0x28] sm:$0xff] %v1688
        %1709 = vst [vmem:[%s1702 + $0x30] sm:$0xff] %v1689
        %1710 = vst [vmem:[%s1702 + $0x38] sm:$0xff] %v1690
        %1711 = vst [vmem:[%s1702 + $0x40] sm:$0xff] %v1691
        %1712 = vst [vmem:[%s1702 + $0x48] sm:$0xff] %v1692
        %1713 = vst [vmem:[%s1702 + $0x50] sm:$0xff] %v1693
        %1714 = vst [vmem:[%s1702 + $0x58] sm:$0xff] %v1694
        %1715 = vst [vmem:[%s1702 + $0x60] sm:$0xff] %v1695
        %1716 = vst [vmem:[%s1702 + $0x68] sm:$0xff] %v1696
        %1717 = vst [vmem:[%s1702 + $0x70] sm:$0xff] %v1697
        %1718 = vst [vmem:[%s1702 + $0x78] sm:$0xff] %v1698
      $region48: #{graphsage_forward.1} parent=43 // pred_fallthru
        _
      %p1719 = scmp.eq.s32.totalorder %s21, 1
      // Predicated region
      $region49: #{graphsage_forward.1} parent=43 // pred_check
        %p1720 = pneg %p1719
      $region50: #{graphsage_forward.1} parent=43 // pred_check_branch
        %1722 = sbr.rel (%p1720) target = $region52
      $region51: #{graphsage_forward.1} parent=43 // pred_region
        %v1723 = vld [vmem:[#allocation2] sm:$0xff]
        %v1724 = vld [vmem:[#allocation2 + $0x8] sm:$0xff]
        %v1725 = vld [vmem:[#allocation2 + $0x10] sm:$0xff]
        %v1726 = vld [vmem:[#allocation2 + $0x18] sm:$0xff]
        %v1727 = vld [vmem:[#allocation2 + $0x20] sm:$0xff]
        %v1728 = vld [vmem:[#allocation2 + $0x28] sm:$0xff]
        %v1729 = vld [vmem:[#allocation2 + $0x30] sm:$0xff]
        %v1730 = vld [vmem:[#allocation2 + $0x38] sm:$0xff]
        %v1731 = vld [vmem:[#allocation2 + $0x40] sm:$0xff]
        %v1732 = vld [vmem:[#allocation2 + $0x48] sm:$0xff]
        %v1733 = vld [vmem:[#allocation2 + $0x50] sm:$0xff]
        %v1734 = vld [vmem:[#allocation2 + $0x58] sm:$0xff]
        %v1735 = vld [vmem:[#allocation2 + $0x60] sm:$0xff]
        %v1736 = vld [vmem:[#allocation2 + $0x68] sm:$0xff]
        %v1737 = vld [vmem:[#allocation2 + $0x70] sm:$0xff]
        %v1738 = vld [vmem:[#allocation2 + $0x78] sm:$0xff]
        %s1739 = sshra.s32 %s300, 4
        %s1740 = sand.u32 %s300, 15
        %s1741 = smul.addr %s1739, 8
        %s1742 = scalar_lea.vmem [#allocation2], %s1741
        %v1743 = vld [vmem:[%s1742] sm:$0xff]
        %v1744 = vld [vmem:[%s1742 + $0x8] sm:$0xff]
        %v1745 = vld [vmem:[%s1742 + $0x10] sm:$0xff]
        %v1746 = vld [vmem:[%s1742 + $0x18] sm:$0xff]
        %v1747 = vld [vmem:[%s1742 + $0x20] sm:$0xff]
        %v1748 = vld [vmem:[%s1742 + $0x28] sm:$0xff]
        %v1749 = vld [vmem:[%s1742 + $0x30] sm:$0xff]
        %v1750 = vld [vmem:[%s1742 + $0x38] sm:$0xff]
        %v1751 = vld [vmem:[%s1742 + $0x40] sm:$0xff]
        %v1752 = vld [vmem:[%s1742 + $0x48] sm:$0xff]
        %v1753 = vld [vmem:[%s1742 + $0x50] sm:$0xff]
        %v1754 = vld [vmem:[%s1742 + $0x58] sm:$0xff]
        %v1755 = vld [vmem:[%s1742 + $0x60] sm:$0xff]
        %v1756 = vld [vmem:[%s1742 + $0x68] sm:$0xff]
        %v1757 = vld [vmem:[%s1742 + $0x70] sm:$0xff]
        %v1758 = vld [vmem:[%s1742 + $0x78] sm:$0xff]
        %v1791 = vunpack.c.l.b16 %v306
        %v1792 = vunpack.c.h.b16 %v306
        %v1793 = vunpack.c.l.b16 %v307
        %v1794 = vunpack.c.h.b16 %v307
        %v1795 = vunpack.c.l.b16 %v308
        %v1796 = vunpack.c.h.b16 %v308
        %v1797 = vunpack.c.l.b16 %v309
        %v1798 = vunpack.c.h.b16 %v309
        %v1799 = vunpack.c.l.b16 %v310
        %v1800 = vunpack.c.h.b16 %v310
        %v1801 = vunpack.c.l.b16 %v311
        %v1802 = vunpack.c.h.b16 %v311
        %v1803 = vunpack.c.l.b16 %v312
        %v1804 = vunpack.c.h.b16 %v312
        %v1805 = vunpack.c.l.b16 %v313
        %v1806 = vunpack.c.h.b16 %v313
        %v1807 = vunpack.c.l.b16 %v314
        %v1808 = vunpack.c.h.b16 %v314
        %v1809 = vunpack.c.l.b16 %v315
        %v1810 = vunpack.c.h.b16 %v315
        %v1811 = vunpack.c.l.b16 %v316
        %v1812 = vunpack.c.h.b16 %v316
        %v1813 = vunpack.c.l.b16 %v317
        %v1814 = vunpack.c.h.b16 %v317
        %v1815 = vunpack.c.l.b16 %v318
        %v1816 = vunpack.c.h.b16 %v318
        %v1817 = vunpack.c.l.b16 %v319
        %v1818 = vunpack.c.h.b16 %v319
        %v1819 = vunpack.c.l.b16 %v320
        %v1820 = vunpack.c.h.b16 %v320
        %v1821 = vunpack.c.l.b16 %v321
        %v1822 = vunpack.c.h.b16 %v321
        %v1823 = vunpack.c.l.b16 %v322
        %v1824 = vunpack.c.h.b16 %v322
        %v1825 = vunpack.c.l.b16 %v323
        %v1826 = vunpack.c.h.b16 %v323
        %v1827 = vunpack.c.l.b16 %v324
        %v1828 = vunpack.c.h.b16 %v324
        %v1829 = vunpack.c.l.b16 %v325
        %v1830 = vunpack.c.h.b16 %v325
        %v1831 = vunpack.c.l.b16 %v326
        %v1832 = vunpack.c.h.b16 %v326
        %v1833 = vunpack.c.l.b16 %v327
        %v1834 = vunpack.c.h.b16 %v327
        %v1835 = vunpack.c.l.b16 %v328
        %v1836 = vunpack.c.h.b16 %v328
        %v1837 = vunpack.c.l.b16 %v329
        %v1838 = vunpack.c.h.b16 %v329
        %v1839 = vunpack.c.l.b16 %v330
        %v1840 = vunpack.c.h.b16 %v330
        %v1841 = vunpack.c.l.b16 %v331
        %v1842 = vunpack.c.h.b16 %v331
        %v1843 = vunpack.c.l.b16 %v332
        %v1844 = vunpack.c.h.b16 %v332
        %v1845 = vunpack.c.l.b16 %v333
        %v1846 = vunpack.c.h.b16 %v333
        %v1847 = vunpack.c.l.b16 %v334
        %v1848 = vunpack.c.h.b16 %v334
        %v1849 = vunpack.c.l.b16 %v335
        %v1850 = vunpack.c.h.b16 %v335
        %v1851 = vunpack.c.l.b16 %v336
        %v1852 = vunpack.c.h.b16 %v336
        %v1853 = vunpack.c.l.b16 %v337
        %v1854 = vunpack.c.h.b16 %v337
        %v1855 = vpack.c.b16 %v1793, %v1791
        %v1856 = vpack.c.b16 %v1794, %v1792
        %v1857 = vpack.c.b16 %v1797, %v1795
        %v1858 = vpack.c.b16 %v1798, %v1796
        %v1859 = vpack.c.b16 %v1801, %v1799
        %v1860 = vpack.c.b16 %v1802, %v1800
        %v1861 = vpack.c.b16 %v1805, %v1803
        %v1862 = vpack.c.b16 %v1806, %v1804
        %v1863 = vpack.c.b16 %v1809, %v1807
        %v1864 = vpack.c.b16 %v1810, %v1808
        %v1865 = vpack.c.b16 %v1813, %v1811
        %v1866 = vpack.c.b16 %v1814, %v1812
        %v1867 = vpack.c.b16 %v1817, %v1815
        %v1868 = vpack.c.b16 %v1818, %v1816
        %v1869 = vpack.c.b16 %v1821, %v1819
        %v1870 = vpack.c.b16 %v1822, %v1820
        %v1871 = vpack.c.b16 %v1825, %v1823
        %v1872 = vpack.c.b16 %v1826, %v1824
        %v1873 = vpack.c.b16 %v1829, %v1827
        %v1874 = vpack.c.b16 %v1830, %v1828
        %v1875 = vpack.c.b16 %v1833, %v1831
        %v1876 = vpack.c.b16 %v1834, %v1832
        %v1877 = vpack.c.b16 %v1837, %v1835
        %v1878 = vpack.c.b16 %v1838, %v1836
        %v1879 = vpack.c.b16 %v1841, %v1839
        %v1880 = vpack.c.b16 %v1842, %v1840
        %v1881 = vpack.c.b16 %v1845, %v1843
        %v1882 = vpack.c.b16 %v1846, %v1844
        %v1883 = vpack.c.b16 %v1849, %v1847
        %v1884 = vpack.c.b16 %v1850, %v1848
        %v1885 = vpack.c.b16 %v1853, %v1851
        %v1886 = vpack.c.b16 %v1854, %v1852
        %1919 = vmatprep.subr.bf16.mxu0 0
        %1920 = vmatpush1.bf16.msra.mxu0 %v1723
        %1921 = vmatprep.subr.bf16.mxu0 0
        %1922 = vmatpush1.bf16.msra.mxu0 %v1724
        %1923 = vmatprep.subr.bf16.mxu0 0
        %1924 = vmatpush1.bf16.msra.mxu0 %v1725
        %1925 = vmatprep.subr.bf16.mxu0 0
        %1926 = vmatpush1.bf16.msra.mxu0 %v1726
        %1927 = vmatprep.subr.bf16.mxu0 0
        %1928 = vmatpush1.bf16.msra.mxu0 %v1727
        %1929 = vmatprep.subr.bf16.mxu0 0
        %1930 = vmatpush1.bf16.msra.mxu0 %v1728
        %1931 = vmatprep.subr.bf16.mxu0 0
        %1932 = vmatpush1.bf16.msra.mxu0 %v1729
        %1933 = vmatprep.subr.bf16.mxu0 0
        %1934 = vmatpush1.bf16.msra.mxu0 %v1730
        %1935 = vmatprep.subr.bf16.mxu0 0
        %1936 = vmatpush1.bf16.msra.mxu0 %v1731
        %1937 = vmatprep.subr.bf16.mxu0 0
        %1938 = vmatpush1.bf16.msra.mxu0 %v1732
        %1939 = vmatprep.subr.bf16.mxu0 0
        %1940 = vmatpush1.bf16.msra.mxu0 %v1733
        %1941 = vmatprep.subr.bf16.mxu0 0
        %1942 = vmatpush1.bf16.msra.mxu0 %v1734
        %1943 = vmatprep.subr.bf16.mxu0 0
        %1944 = vmatpush1.bf16.msra.mxu0 %v1735
        %1945 = vmatprep.subr.bf16.mxu0 0
        %1946 = vmatpush1.bf16.msra.mxu0 %v1736
        %1947 = vmatprep.subr.bf16.mxu0 0
        %1948 = vmatpush1.bf16.msra.mxu0 %v1737
        %1949 = vmatprep.subr.bf16.mxu0 0
        %1950 = vmatpush1.bf16.msra.mxu0 %v1738
        %1951 = vmatprep.mubr.bf16.mxu0 %v1856
        %1952 = vmatmul.mubr.bf16.gmra.mrb[0].mxu0 %v1855
        %v1953 = vpop.f32.mrb[0].mxu0
        %v1954 = vadd.f32 0.0, %v1953
        %v1955 = vpop.f32.mrb[0].mxu0
        %v1956 = vpop.f32.mrb[0].mxu0
        %v1957 = vadd.f32 0.0, %v1956
        %v1958 = vpop.f32.mrb[0].mxu0
        %1959 = vmatprep.mubr.bf16.mxu0 %v1858
        %1960 = vmatmul.mubr.bf16.gmra.mrb[0].mxu0 %v1857
        %v1961 = vpop.f32.mrb[0].mxu0
        %v1962 = vadd.f32 0.0, %v1961
        %v1963 = vpop.f32.mrb[0].mxu0
        %v1964 = vpop.f32.mrb[0].mxu0
        %v1965 = vadd.f32 0.0, %v1964
        %v1966 = vpop.f32.mrb[0].mxu0
        %1967 = vmatprep.mubr.bf16.mxu0 %v1860
        %1968 = vmatmul.mubr.bf16.gmra.mrb[0].mxu0 %v1859
        %v1969 = vpop.f32.mrb[0].mxu0
        %v1970 = vadd.f32 0.0, %v1969
        %v1971 = vpop.f32.mrb[0].mxu0
        %v1972 = vpop.f32.mrb[0].mxu0
        %v1973 = vadd.f32 0.0, %v1972
        %v1974 = vpop.f32.mrb[0].mxu0
        %1975 = vmatprep.mubr.bf16.mxu0 %v1862
        %1976 = vmatmul.mubr.bf16.gmra.mrb[0].mxu0 %v1861
        %v1977 = vpop.f32.mrb[0].mxu0
        %v1978 = vadd.f32 0.0, %v1977
        %v1979 = vpop.f32.mrb[0].mxu0
        %v1980 = vpop.f32.mrb[0].mxu0
        %v1981 = vadd.f32 0.0, %v1980
        %v1982 = vpop.f32.mrb[0].mxu0
        %1983 = vmatprep.mubr.bf16.mxu0 %v1864
        %1984 = vmatmul.mubr.bf16.gmra.mrb[0].mxu0 %v1863
        %v1985 = vpop.f32.mrb[0].mxu0
        %v1986 = vadd.f32 0.0, %v1985
        %v1987 = vpop.f32.mrb[0].mxu0
        %v1988 = vpop.f32.mrb[0].mxu0
        %v1989 = vadd.f32 0.0, %v1988
        %v1990 = vpop.f32.mrb[0].mxu0
        %1991 = vmatprep.mubr.bf16.mxu0 %v1866
        %1992 = vmatmul.mubr.bf16.gmra.mrb[0].mxu0 %v1865
        %v1993 = vpop.f32.mrb[0].mxu0
        %v1994 = vadd.f32 0.0, %v1993
        %v1995 = vpop.f32.mrb[0].mxu0
        %v1996 = vpop.f32.mrb[0].mxu0
        %v1997 = vadd.f32 0.0, %v1996
        %v1998 = vpop.f32.mrb[0].mxu0
        %1999 = vmatprep.mubr.bf16.mxu0 %v1868
        %2000 = vmatmul.mubr.bf16.gmra.mrb[0].mxu0 %v1867
        %v2001 = vpop.f32.mrb[0].mxu0
        %v2002 = vadd.f32 0.0, %v2001
        %v2003 = vpop.f32.mrb[0].mxu0
        %v2004 = vpop.f32.mrb[0].mxu0
        %v2005 = vadd.f32 0.0, %v2004
        %v2006 = vpop.f32.mrb[0].mxu0
        %2007 = vmatprep.mubr.bf16.mxu0 %v1870
        %2008 = vmatmul.mubr.bf16.gmra.mrb[0].mxu0 %v1869
        %v2009 = vpop.f32.mrb[0].mxu0
        %v2010 = vadd.f32 0.0, %v2009
        %v2011 = vpop.f32.mrb[0].mxu0
        %v2012 = vpop.f32.mrb[0].mxu0
        %v2013 = vadd.f32 0.0, %v2012
        %v2014 = vpop.f32.mrb[0].mxu0
        %2015 = vmatprep.mubr.bf16.mxu0 %v1872
        %2016 = vmatmul.mubr.bf16.gmra.mrb[0].mxu0 %v1871
        %v2017 = vpop.f32.mrb[0].mxu0
        %v2018 = vadd.f32 0.0, %v2017
        %v2019 = vpop.f32.mrb[0].mxu0
        %v2020 = vpop.f32.mrb[0].mxu0
        %v2021 = vadd.f32 0.0, %v2020
        %v2022 = vpop.f32.mrb[0].mxu0
        %2023 = vmatprep.mubr.bf16.mxu0 %v1874
        %2024 = vmatmul.mubr.bf16.gmra.mrb[0].mxu0 %v1873
        %v2025 = vpop.f32.mrb[0].mxu0
        %v2026 = vadd.f32 0.0, %v2025
        %v2027 = vpop.f32.mrb[0].mxu0
        %v2028 = vpop.f32.mrb[0].mxu0
        %v2029 = vadd.f32 0.0, %v2028
        %v2030 = vpop.f32.mrb[0].mxu0
        %2031 = vmatprep.mubr.bf16.mxu0 %v1876
        %2032 = vmatmul.mubr.bf16.gmra.mrb[0].mxu0 %v1875
        %v2033 = vpop.f32.mrb[0].mxu0
        %v2034 = vadd.f32 0.0, %v2033
        %v2035 = vpop.f32.mrb[0].mxu0
        %v2036 = vpop.f32.mrb[0].mxu0
        %v2037 = vadd.f32 0.0, %v2036
        %v2038 = vpop.f32.mrb[0].mxu0
        %2039 = vmatprep.mubr.bf16.mxu0 %v1878
        %2040 = vmatmul.mubr.bf16.gmra.mrb[0].mxu0 %v1877
        %v2041 = vpop.f32.mrb[0].mxu0
        %v2042 = vadd.f32 0.0, %v2041
        %v2043 = vpop.f32.mrb[0].mxu0
        %v2044 = vpop.f32.mrb[0].mxu0
        %v2045 = vadd.f32 0.0, %v2044
        %v2046 = vpop.f32.mrb[0].mxu0
        %2047 = vmatprep.mubr.bf16.mxu0 %v1880
        %2048 = vmatmul.mubr.bf16.gmra.mrb[0].mxu0 %v1879
        %v2049 = vpop.f32.mrb[0].mxu0
        %v2050 = vadd.f32 0.0, %v2049
        %v2051 = vpop.f32.mrb[0].mxu0
        %v2052 = vpop.f32.mrb[0].mxu0
        %v2053 = vadd.f32 0.0, %v2052
        %v2054 = vpop.f32.mrb[0].mxu0
        %2055 = vmatprep.mubr.bf16.mxu0 %v1882
        %2056 = vmatmul.mubr.bf16.gmra.mrb[0].mxu0 %v1881
        %v2057 = vpop.f32.mrb[0].mxu0
        %v2058 = vadd.f32 0.0, %v2057
        %v2059 = vpop.f32.mrb[0].mxu0
        %v2060 = vpop.f32.mrb[0].mxu0
        %v2061 = vadd.f32 0.0, %v2060
        %v2062 = vpop.f32.mrb[0].mxu0
        %2063 = vmatprep.mubr.bf16.mxu0 %v1884
        %2064 = vmatmul.mubr.bf16.gmra.mrb[0].mxu0 %v1883
        %v2065 = vpop.f32.mrb[0].mxu0
        %v2066 = vadd.f32 0.0, %v2065
        %v2067 = vpop.f32.mrb[0].mxu0
        %v2068 = vpop.f32.mrb[0].mxu0
        %v2069 = vadd.f32 0.0, %v2068
        %v2070 = vpop.f32.mrb[0].mxu0
        %2071 = vmatprep.mubr.bf16.mxu0 %v1886
        %2072 = vmatmul.mubr.bf16.gmra.mrb[0].mxu0 %v1885
        %v2073 = vpop.f32.mrb[0].mxu0
        %v2074 = vadd.f32 0.0, %v2073
        %v2075 = vpop.f32.mrb[0].mxu0
        %v2076 = vpop.f32.mrb[0].mxu0
        %v2077 = vadd.f32 0.0, %v2076
        %v2078 = vpop.f32.mrb[0].mxu0
        %2079 = vdwg.mxu0
        %2081 = vset.pattern.permute.xlu0 0
        %2082 = vperm.xlu0 %2081, %v339
        %v2083 = vpop.permute.xlu0 %2082
        %2086 = vset.pattern.permute.xlu0 0
        %2087 = vperm.xlu0 %2086, %v340
        %v2088 = vpop.permute.xlu0 %2087
        %2091 = vset.pattern.permute.xlu0 0
        %2092 = vperm.xlu0 %2091, %v341
        %v2093 = vpop.permute.xlu0 %2092
        %2096 = vset.pattern.permute.xlu0 0
        %2097 = vperm.xlu0 %2096, %v342
        %v2098 = vpop.permute.xlu0 %2097
        %2101 = vset.pattern.permute.xlu0 0
        %2102 = vperm.xlu0 %2101, %v343
        %v2103 = vpop.permute.xlu0 %2102
        %2106 = vset.pattern.permute.xlu0 0
        %2107 = vperm.xlu0 %2106, %v344
        %v2108 = vpop.permute.xlu0 %2107
        %2111 = vset.pattern.permute.xlu0 0
        %2112 = vperm.xlu0 %2111, %v345
        %v2113 = vpop.permute.xlu0 %2112
        %2116 = vset.pattern.permute.xlu0 0
        %2117 = vperm.xlu0 %2116, %v346
        %v2118 = vpop.permute.xlu0 %2117
        %2121 = vset.pattern.permute.xlu0 0
        %2122 = vperm.xlu0 %2121, %v347
        %v2123 = vpop.permute.xlu0 %2122
        %2126 = vset.pattern.permute.xlu0 0
        %2127 = vperm.xlu0 %2126, %v348
        %v2128 = vpop.permute.xlu0 %2127
        %2131 = vset.pattern.permute.xlu0 0
        %2132 = vperm.xlu0 %2131, %v349
        %v2133 = vpop.permute.xlu0 %2132
        %2136 = vset.pattern.permute.xlu0 0
        %2137 = vperm.xlu0 %2136, %v350
        %v2138 = vpop.permute.xlu0 %2137
        %2141 = vset.pattern.permute.xlu0 0
        %2142 = vperm.xlu0 %2141, %v351
        %v2143 = vpop.permute.xlu0 %2142
        %2146 = vset.pattern.permute.xlu0 0
        %2147 = vperm.xlu0 %2146, %v352
        %v2148 = vpop.permute.xlu0 %2147
        %2151 = vset.pattern.permute.xlu0 0
        %2152 = vperm.xlu0 %2151, %v353
        %v2153 = vpop.permute.xlu0 %2152
        %2156 = vset.pattern.permute.xlu0 0
        %2157 = vperm.xlu0 %2156, %v354
        %v2158 = vpop.permute.xlu0 %2157
        %2161 = vset.pattern.permute.xlu0 0
        %2162 = vperm.xlu0 %2161, %v355
        %v2163 = vpop.permute.xlu0 %2162
        %2166 = vset.pattern.permute.xlu0 0
        %2167 = vperm.xlu0 %2166, %v356
        %v2168 = vpop.permute.xlu0 %2167
        %2171 = vset.pattern.permute.xlu0 0
        %2172 = vperm.xlu0 %2171, %v357
        %v2173 = vpop.permute.xlu0 %2172
        %2176 = vset.pattern.permute.xlu0 0
        %2177 = vperm.xlu0 %2176, %v358
        %v2178 = vpop.permute.xlu0 %2177
        %2181 = vset.pattern.permute.xlu0 0
        %2182 = vperm.xlu0 %2181, %v359
        %v2183 = vpop.permute.xlu0 %2182
        %2186 = vset.pattern.permute.xlu0 0
        %2187 = vperm.xlu0 %2186, %v360
        %v2188 = vpop.permute.xlu0 %2187
        %2191 = vset.pattern.permute.xlu0 0
        %2192 = vperm.xlu0 %2191, %v361
        %v2193 = vpop.permute.xlu0 %2192
        %2196 = vset.pattern.permute.xlu0 0
        %2197 = vperm.xlu0 %2196, %v362
        %v2198 = vpop.permute.xlu0 %2197
        %2201 = vset.pattern.permute.xlu0 0
        %2202 = vperm.xlu0 %2201, %v363
        %v2203 = vpop.permute.xlu0 %2202
        %2206 = vset.pattern.permute.xlu0 0
        %2207 = vperm.xlu0 %2206, %v364
        %v2208 = vpop.permute.xlu0 %2207
        %2211 = vset.pattern.permute.xlu0 0
        %2212 = vperm.xlu0 %2211, %v365
        %v2213 = vpop.permute.xlu0 %2212
        %2216 = vset.pattern.permute.xlu0 0
        %2217 = vperm.xlu0 %2216, %v366
        %v2218 = vpop.permute.xlu0 %2217
        %2221 = vset.pattern.permute.xlu0 0
        %2222 = vperm.xlu0 %2221, %v367
        %v2223 = vpop.permute.xlu0 %2222
        %2226 = vset.pattern.permute.xlu0 0
        %2227 = vperm.xlu0 %2226, %v368
        %v2228 = vpop.permute.xlu0 %2227
        %2231 = vset.pattern.permute.xlu0 0
        %2232 = vperm.xlu0 %2231, %v369
        %v2233 = vpop.permute.xlu0 %2232
        %2236 = vset.pattern.permute.xlu0 0
        %2237 = vperm.xlu0 %2236, %v370
        %v2238 = vpop.permute.xlu0 %2237
        %v2240 = vmul.f32 %v1954, %v2083
        %v2241 = vmul.f32 %v1957, %v2088
        %v2242 = vmul.f32 %v1962, %v2093
        %v2243 = vmul.f32 %v1965, %v2098
        %v2244 = vmul.f32 %v1970, %v2103
        %v2245 = vmul.f32 %v1973, %v2108
        %v2246 = vmul.f32 %v1978, %v2113
        %v2247 = vmul.f32 %v1981, %v2118
        %v2248 = vmul.f32 %v1986, %v2123
        %v2249 = vmul.f32 %v1989, %v2128
        %v2250 = vmul.f32 %v1994, %v2133
        %v2251 = vmul.f32 %v1997, %v2138
        %v2252 = vmul.f32 %v2002, %v2143
        %v2253 = vmul.f32 %v2005, %v2148
        %v2254 = vmul.f32 %v2010, %v2153
        %v2255 = vmul.f32 %v2013, %v2158
        %v2256 = vmul.f32 %v2018, %v2163
        %v2257 = vmul.f32 %v2021, %v2168
        %v2258 = vmul.f32 %v2026, %v2173
        %v2259 = vmul.f32 %v2029, %v2178
        %v2260 = vmul.f32 %v2034, %v2183
        %v2261 = vmul.f32 %v2037, %v2188
        %v2262 = vmul.f32 %v2042, %v2193
        %v2263 = vmul.f32 %v2045, %v2198
        %v2264 = vmul.f32 %v2050, %v2203
        %v2265 = vmul.f32 %v2053, %v2208
        %v2266 = vmul.f32 %v2058, %v2213
        %v2267 = vmul.f32 %v2061, %v2218
        %v2268 = vmul.f32 %v2066, %v2223
        %v2269 = vmul.f32 %v2069, %v2228
        %v2270 = vmul.f32 %v2074, %v2233
        %v2271 = vmul.f32 %v2077, %v2238
        %v2272 = vpack.c.bf16 %v2241, %v2240
        %v2273 = vpack.c.bf16 %v2243, %v2242
        %v2274 = vpack.c.bf16 %v2245, %v2244
        %v2275 = vpack.c.bf16 %v2247, %v2246
        %v2276 = vpack.c.bf16 %v2249, %v2248
        %v2277 = vpack.c.bf16 %v2251, %v2250
        %v2278 = vpack.c.bf16 %v2253, %v2252
        %v2279 = vpack.c.bf16 %v2255, %v2254
        %v2280 = vpack.c.bf16 %v2257, %v2256
        %v2281 = vpack.c.bf16 %v2259, %v2258
        %v2282 = vpack.c.bf16 %v2261, %v2260
        %v2283 = vpack.c.bf16 %v2263, %v2262
        %v2284 = vpack.c.bf16 %v2265, %v2264
        %v2285 = vpack.c.bf16 %v2267, %v2266
        %v2286 = vpack.c.bf16 %v2269, %v2268
        %v2287 = vpack.c.bf16 %v2271, %v2270
        %v2304 = vunpack.c.l.b16 %v387
        %v2305 = vunpack.c.l.b16 %v388
        %v2306 = vunpack.c.l.b16 %v389
        %v2307 = vunpack.c.l.b16 %v390
        %v2308 = vunpack.c.l.b16 %v391
        %v2309 = vunpack.c.l.b16 %v392
        %v2310 = vunpack.c.l.b16 %v393
        %v2311 = vunpack.c.l.b16 %v394
        %v2312 = vunpack.c.l.b16 %v395
        %v2313 = vunpack.c.l.b16 %v396
        %v2314 = vunpack.c.l.b16 %v397
        %v2315 = vunpack.c.l.b16 %v398
        %v2316 = vunpack.c.l.b16 %v399
        %v2317 = vunpack.c.l.b16 %v400
        %v2318 = vunpack.c.l.b16 %v401
        %v2319 = vunpack.c.l.b16 %v402
        %v2320 = vpack.c.b16 %v2305, %v2304
        %v2321 = vpack.c.b16 %v2307, %v2306
        %v2322 = vpack.c.b16 %v2309, %v2308
        %v2323 = vpack.c.b16 %v2311, %v2310
        %v2324 = vpack.c.b16 %v2313, %v2312
        %v2325 = vpack.c.b16 %v2315, %v2314
        %v2326 = vpack.c.b16 %v2317, %v2316
        %v2327 = vpack.c.b16 %v2319, %v2318
        %2336 = vmatprep.subr.bf16.mxu0 0
        %2337 = vmatpush1.bf16.msra.mxu0 %v2320
        %2338 = vmatprep.subr.bf16.mxu0 0
        %2339 = vmatpush1.bf16.msra.mxu0 %v2321
        %2340 = vmatprep.subr.bf16.mxu0 0
        %2341 = vmatpush1.bf16.msra.mxu0 %v2322
        %2342 = vmatprep.subr.bf16.mxu0 0
        %2343 = vmatpush1.bf16.msra.mxu0 %v2323
        %2344 = vmatprep.subr.bf16.mxu0 0
        %2345 = vmatpush1.bf16.msra.mxu0 %v2324
        %2346 = vmatprep.subr.bf16.mxu0 0
        %2347 = vmatpush1.bf16.msra.mxu0 %v2325
        %2348 = vmatprep.subr.bf16.mxu0 0
        %2349 = vmatpush1.bf16.msra.mxu0 %v2326
        %2350 = vmatprep.subr.bf16.mxu0 0
        %2351 = vmatpush1.bf16.msra.mxu0 %v2327
        %2352 = vmatprep.subr.bf16.mxu0 0
        %2353 = vmatpush1.bf16.msra.mxu0 0
        %2354 = vmatprep.subr.bf16.mxu0 0
        %2355 = vmatpush1.bf16.msra.mxu0 0
        %2356 = vmatprep.subr.bf16.mxu0 0
        %2357 = vmatpush1.bf16.msra.mxu0 0
        %2358 = vmatprep.subr.bf16.mxu0 0
        %2359 = vmatpush1.bf16.msra.mxu0 0
        %2360 = vmatprep.subr.bf16.mxu0 0
        %2361 = vmatpush1.bf16.msra.mxu0 0
        %2362 = vmatprep.subr.bf16.mxu0 0
        %2363 = vmatpush1.bf16.msra.mxu0 0
        %2364 = vmatprep.subr.bf16.mxu0 0
        %2365 = vmatpush1.bf16.msra.mxu0 0
        %2366 = vmatprep.subr.bf16.mxu0 0
        %2367 = vmatpush1.bf16.msra.mxu0 0
        %2368 = vmatprep.mubr.bf16.mxu0 0
        %2369 = vmatmul.mubr.bf16.gmra.mrb[0].mxu0 %v1743
        %v2370 = vpop.f32.mrb[0].mxu0
        %v2371 = vadd.f32 0.0, %v2370
        %v2372 = vpop.f32.mrb[0].mxu0
        %v2373 = vpop.f32.mrb[0].mxu0
        %v2374 = vadd.f32 0.0, %v2373
        %v2375 = vpop.f32.mrb[0].mxu0
        %2376 = vmatprep.mubr.bf16.mxu0 0
        %2377 = vmatmul.mubr.bf16.gmra.mrb[0].mxu0 %v1744
        %v2378 = vpop.f32.mrb[0].mxu0
        %v2379 = vadd.f32 0.0, %v2378
        %v2380 = vpop.f32.mrb[0].mxu0
        %v2381 = vpop.f32.mrb[0].mxu0
        %v2382 = vadd.f32 0.0, %v2381
        %v2383 = vpop.f32.mrb[0].mxu0
        %2384 = vmatprep.mubr.bf16.mxu0 0
        %2385 = vmatmul.mubr.bf16.gmra.mrb[0].mxu0 %v1745
        %v2386 = vpop.f32.mrb[0].mxu0
        %v2387 = vadd.f32 0.0, %v2386
        %v2388 = vpop.f32.mrb[0].mxu0
        %v2389 = vpop.f32.mrb[0].mxu0
        %v2390 = vadd.f32 0.0, %v2389
        %v2391 = vpop.f32.mrb[0].mxu0
        %2392 = vmatprep.mubr.bf16.mxu0 0
        %2393 = vmatmul.mubr.bf16.gmra.mrb[0].mxu0 %v1746
        %v2394 = vpop.f32.mrb[0].mxu0
        %v2395 = vadd.f32 0.0, %v2394
        %v2396 = vpop.f32.mrb[0].mxu0
        %v2397 = vpop.f32.mrb[0].mxu0
        %v2398 = vadd.f32 0.0, %v2397
        %v2399 = vpop.f32.mrb[0].mxu0
        %2400 = vmatprep.mubr.bf16.mxu0 0
        %2401 = vmatmul.mubr.bf16.gmra.mrb[0].mxu0 %v1747
        %v2402 = vpop.f32.mrb[0].mxu0
        %v2403 = vadd.f32 0.0, %v2402
        %v2404 = vpop.f32.mrb[0].mxu0
        %v2405 = vpop.f32.mrb[0].mxu0
        %v2406 = vadd.f32 0.0, %v2405
        %v2407 = vpop.f32.mrb[0].mxu0
        %2408 = vmatprep.mubr.bf16.mxu0 0
        %2409 = vmatmul.mubr.bf16.gmra.mrb[0].mxu0 %v1748
        %v2410 = vpop.f32.mrb[0].mxu0
        %v2411 = vadd.f32 0.0, %v2410
        %v2412 = vpop.f32.mrb[0].mxu0
        %v2413 = vpop.f32.mrb[0].mxu0
        %v2414 = vadd.f32 0.0, %v2413
        %v2415 = vpop.f32.mrb[0].mxu0
        %2416 = vmatprep.mubr.bf16.mxu0 0
        %2417 = vmatmul.mubr.bf16.gmra.mrb[0].mxu0 %v1749
        %v2418 = vpop.f32.mrb[0].mxu0
        %v2419 = vadd.f32 0.0, %v2418
        %v2420 = vpop.f32.mrb[0].mxu0
        %v2421 = vpop.f32.mrb[0].mxu0
        %v2422 = vadd.f32 0.0, %v2421
        %v2423 = vpop.f32.mrb[0].mxu0
        %2424 = vmatprep.mubr.bf16.mxu0 0
        %2425 = vmatmul.mubr.bf16.gmra.mrb[0].mxu0 %v1750
        %v2426 = vpop.f32.mrb[0].mxu0
        %v2427 = vadd.f32 0.0, %v2426
        %v2428 = vpop.f32.mrb[0].mxu0
        %v2429 = vpop.f32.mrb[0].mxu0
        %v2430 = vadd.f32 0.0, %v2429
        %v2431 = vpop.f32.mrb[0].mxu0
        %2432 = vmatprep.mubr.bf16.mxu0 0
        %2433 = vmatmul.mubr.bf16.gmra.mrb[0].mxu0 %v1751
        %v2434 = vpop.f32.mrb[0].mxu0
        %v2435 = vadd.f32 0.0, %v2434
        %v2436 = vpop.f32.mrb[0].mxu0
        %v2437 = vpop.f32.mrb[0].mxu0
        %v2438 = vadd.f32 0.0, %v2437
        %v2439 = vpop.f32.mrb[0].mxu0
        %2440 = vmatprep.mubr.bf16.mxu0 0
        %2441 = vmatmul.mubr.bf16.gmra.mrb[0].mxu0 %v1752
        %v2442 = vpop.f32.mrb[0].mxu0
        %v2443 = vadd.f32 0.0, %v2442
        %v2444 = vpop.f32.mrb[0].mxu0
        %v2445 = vpop.f32.mrb[0].mxu0
        %v2446 = vadd.f32 0.0, %v2445
        %v2447 = vpop.f32.mrb[0].mxu0
        %2448 = vmatprep.mubr.bf16.mxu0 0
        %2449 = vmatmul.mubr.bf16.gmra.mrb[0].mxu0 %v1753
        %v2450 = vpop.f32.mrb[0].mxu0
        %v2451 = vadd.f32 0.0, %v2450
        %v2452 = vpop.f32.mrb[0].mxu0
        %v2453 = vpop.f32.mrb[0].mxu0
        %v2454 = vadd.f32 0.0, %v2453
        %v2455 = vpop.f32.mrb[0].mxu0
        %2456 = vmatprep.mubr.bf16.mxu0 0
        %2457 = vmatmul.mubr.bf16.gmra.mrb[0].mxu0 %v1754
        %v2458 = vpop.f32.mrb[0].mxu0
        %v2459 = vadd.f32 0.0, %v2458
        %v2460 = vpop.f32.mrb[0].mxu0
        %v2461 = vpop.f32.mrb[0].mxu0
        %v2462 = vadd.f32 0.0, %v2461
        %v2463 = vpop.f32.mrb[0].mxu0
        %2464 = vmatprep.mubr.bf16.mxu0 0
        %2465 = vmatmul.mubr.bf16.gmra.mrb[0].mxu0 %v1755
        %v2466 = vpop.f32.mrb[0].mxu0
        %v2467 = vadd.f32 0.0, %v2466
        %v2468 = vpop.f32.mrb[0].mxu0
        %v2469 = vpop.f32.mrb[0].mxu0
        %v2470 = vadd.f32 0.0, %v2469
        %v2471 = vpop.f32.mrb[0].mxu0
        %2472 = vmatprep.mubr.bf16.mxu0 0
        %2473 = vmatmul.mubr.bf16.gmra.mrb[0].mxu0 %v1756
        %v2474 = vpop.f32.mrb[0].mxu0
        %v2475 = vadd.f32 0.0, %v2474
        %v2476 = vpop.f32.mrb[0].mxu0
        %v2477 = vpop.f32.mrb[0].mxu0
        %v2478 = vadd.f32 0.0, %v2477
        %v2479 = vpop.f32.mrb[0].mxu0
        %2480 = vmatprep.mubr.bf16.mxu0 0
        %2481 = vmatmul.mubr.bf16.gmra.mrb[0].mxu0 %v1757
        %v2482 = vpop.f32.mrb[0].mxu0
        %v2483 = vadd.f32 0.0, %v2482
        %v2484 = vpop.f32.mrb[0].mxu0
        %v2485 = vpop.f32.mrb[0].mxu0
        %v2486 = vadd.f32 0.0, %v2485
        %v2487 = vpop.f32.mrb[0].mxu0
        %2488 = vmatprep.mubr.bf16.mxu0 0
        %2489 = vmatmul.mubr.bf16.gmra.mrb[0].mxu0 %v1758
        %v2490 = vpop.f32.mrb[0].mxu0
        %v2491 = vadd.f32 0.0, %v2490
        %v2492 = vpop.f32.mrb[0].mxu0
        %v2493 = vpop.f32.mrb[0].mxu0
        %v2494 = vadd.f32 0.0, %v2493
        %v2495 = vpop.f32.mrb[0].mxu0
        %2496 = vdwg.mxu0
        %v2513 = vunpack.c.l.b16 %v371
        %v2514 = vunpack.c.l.b16 %v372
        %v2515 = vunpack.c.l.b16 %v373
        %v2516 = vunpack.c.l.b16 %v374
        %v2517 = vunpack.c.l.b16 %v375
        %v2518 = vunpack.c.l.b16 %v376
        %v2519 = vunpack.c.l.b16 %v377
        %v2520 = vunpack.c.l.b16 %v378
        %v2521 = vunpack.c.l.b16 %v379
        %v2522 = vunpack.c.l.b16 %v380
        %v2523 = vunpack.c.l.b16 %v381
        %v2524 = vunpack.c.l.b16 %v382
        %v2525 = vunpack.c.l.b16 %v383
        %v2526 = vunpack.c.l.b16 %v384
        %v2527 = vunpack.c.l.b16 %v385
        %v2528 = vunpack.c.l.b16 %v386
        %v2529 = vpack.c.b16 %v2514, %v2513
        %v2530 = vpack.c.b16 %v2516, %v2515
        %v2531 = vpack.c.b16 %v2518, %v2517
        %v2532 = vpack.c.b16 %v2520, %v2519
        %v2533 = vpack.c.b16 %v2522, %v2521
        %v2534 = vpack.c.b16 %v2524, %v2523
        %v2535 = vpack.c.b16 %v2526, %v2525
        %v2536 = vpack.c.b16 %v2528, %v2527
        %2545 = vmatprep.subr.bf16.mxu0 0
        %2546 = vmatpush1.bf16.msra.mxu0 %v2529
        %2547 = vmatprep.subr.bf16.mxu0 0
        %2548 = vmatpush1.bf16.msra.mxu0 %v2530
        %2549 = vmatprep.subr.bf16.mxu0 0
        %2550 = vmatpush1.bf16.msra.mxu0 %v2531
        %2551 = vmatprep.subr.bf16.mxu0 0
        %2552 = vmatpush1.bf16.msra.mxu0 %v2532
        %2553 = vmatprep.subr.bf16.mxu0 0
        %2554 = vmatpush1.bf16.msra.mxu0 %v2533
        %2555 = vmatprep.subr.bf16.mxu0 0
        %2556 = vmatpush1.bf16.msra.mxu0 %v2534
        %2557 = vmatprep.subr.bf16.mxu0 0
        %2558 = vmatpush1.bf16.msra.mxu0 %v2535
        %2559 = vmatprep.subr.bf16.mxu0 0
        %2560 = vmatpush1.bf16.msra.mxu0 %v2536
        %2561 = vmatprep.subr.bf16.mxu0 0
        %2562 = vmatpush1.bf16.msra.mxu0 0
        %2563 = vmatprep.subr.bf16.mxu0 0
        %2564 = vmatpush1.bf16.msra.mxu0 0
        %2565 = vmatprep.subr.bf16.mxu0 0
        %2566 = vmatpush1.bf16.msra.mxu0 0
        %2567 = vmatprep.subr.bf16.mxu0 0
        %2568 = vmatpush1.bf16.msra.mxu0 0
        %2569 = vmatprep.subr.bf16.mxu0 0
        %2570 = vmatpush1.bf16.msra.mxu0 0
        %2571 = vmatprep.subr.bf16.mxu0 0
        %2572 = vmatpush1.bf16.msra.mxu0 0
        %2573 = vmatprep.subr.bf16.mxu0 0
        %2574 = vmatpush1.bf16.msra.mxu0 0
        %2575 = vmatprep.subr.bf16.mxu0 0
        %2576 = vmatpush1.bf16.msra.mxu0 0
        %2577 = vmatprep.mubr.bf16.mxu0 0
        %2578 = vmatmul.mubr.bf16.gmra.mrb[0].mxu0 %v2272
        %v2579 = vpop.f32.mrb[0].mxu0
        %v2580 = vadd.f32 %v2371, %v2579
        %v2581 = vpop.f32.mrb[0].mxu0
        %v2582 = vpop.f32.mrb[0].mxu0
        %v2583 = vadd.f32 %v2374, %v2582
        %v2584 = vpop.f32.mrb[0].mxu0
        %2585 = vmatprep.mubr.bf16.mxu0 0
        %2586 = vmatmul.mubr.bf16.gmra.mrb[0].mxu0 %v2273
        %v2587 = vpop.f32.mrb[0].mxu0
        %v2588 = vadd.f32 %v2379, %v2587
        %v2589 = vpop.f32.mrb[0].mxu0
        %v2590 = vpop.f32.mrb[0].mxu0
        %v2591 = vadd.f32 %v2382, %v2590
        %v2592 = vpop.f32.mrb[0].mxu0
        %2593 = vmatprep.mubr.bf16.mxu0 0
        %2594 = vmatmul.mubr.bf16.gmra.mrb[0].mxu0 %v2274
        %v2595 = vpop.f32.mrb[0].mxu0
        %v2596 = vadd.f32 %v2387, %v2595
        %v2597 = vpop.f32.mrb[0].mxu0
        %v2598 = vpop.f32.mrb[0].mxu0
        %v2599 = vadd.f32 %v2390, %v2598
        %v2600 = vpop.f32.mrb[0].mxu0
        %2601 = vmatprep.mubr.bf16.mxu0 0
        %2602 = vmatmul.mubr.bf16.gmra.mrb[0].mxu0 %v2275
        %v2603 = vpop.f32.mrb[0].mxu0
        %v2604 = vadd.f32 %v2395, %v2603
        %v2605 = vpop.f32.mrb[0].mxu0
        %v2606 = vpop.f32.mrb[0].mxu0
        %v2607 = vadd.f32 %v2398, %v2606
        %v2608 = vpop.f32.mrb[0].mxu0
        %2609 = vmatprep.mubr.bf16.mxu0 0
        %2610 = vmatmul.mubr.bf16.gmra.mrb[0].mxu0 %v2276
        %v2611 = vpop.f32.mrb[0].mxu0
        %v2612 = vadd.f32 %v2403, %v2611
        %v2613 = vpop.f32.mrb[0].mxu0
        %v2614 = vpop.f32.mrb[0].mxu0
        %v2615 = vadd.f32 %v2406, %v2614
        %v2616 = vpop.f32.mrb[0].mxu0
        %2617 = vmatprep.mubr.bf16.mxu0 0
        %2618 = vmatmul.mubr.bf16.gmra.mrb[0].mxu0 %v2277
        %v2619 = vpop.f32.mrb[0].mxu0
        %v2620 = vadd.f32 %v2411, %v2619
        %v2621 = vpop.f32.mrb[0].mxu0
        %v2622 = vpop.f32.mrb[0].mxu0
        %v2623 = vadd.f32 %v2414, %v2622
        %v2624 = vpop.f32.mrb[0].mxu0
        %2625 = vmatprep.mubr.bf16.mxu0 0
        %2626 = vmatmul.mubr.bf16.gmra.mrb[0].mxu0 %v2278
        %v2627 = vpop.f32.mrb[0].mxu0
        %v2628 = vadd.f32 %v2419, %v2627
        %v2629 = vpop.f32.mrb[0].mxu0
        %v2630 = vpop.f32.mrb[0].mxu0
        %v2631 = vadd.f32 %v2422, %v2630
        %v2632 = vpop.f32.mrb[0].mxu0
        %2633 = vmatprep.mubr.bf16.mxu0 0
        %2634 = vmatmul.mubr.bf16.gmra.mrb[0].mxu0 %v2279
        %v2635 = vpop.f32.mrb[0].mxu0
        %v2636 = vadd.f32 %v2427, %v2635
        %v2637 = vpop.f32.mrb[0].mxu0
        %v2638 = vpop.f32.mrb[0].mxu0
        %v2639 = vadd.f32 %v2430, %v2638
        %v2640 = vpop.f32.mrb[0].mxu0
        %2641 = vmatprep.mubr.bf16.mxu0 0
        %2642 = vmatmul.mubr.bf16.gmra.mrb[0].mxu0 %v2280
        %v2643 = vpop.f32.mrb[0].mxu0
        %v2644 = vadd.f32 %v2435, %v2643
        %v2645 = vpop.f32.mrb[0].mxu0
        %v2646 = vpop.f32.mrb[0].mxu0
        %v2647 = vadd.f32 %v2438, %v2646
        %v2648 = vpop.f32.mrb[0].mxu0
        %2649 = vmatprep.mubr.bf16.mxu0 0
        %2650 = vmatmul.mubr.bf16.gmra.mrb[0].mxu0 %v2281
        %v2651 = vpop.f32.mrb[0].mxu0
        %v2652 = vadd.f32 %v2443, %v2651
        %v2653 = vpop.f32.mrb[0].mxu0
        %v2654 = vpop.f32.mrb[0].mxu0
        %v2655 = vadd.f32 %v2446, %v2654
        %v2656 = vpop.f32.mrb[0].mxu0
        %2657 = vmatprep.mubr.bf16.mxu0 0
        %2658 = vmatmul.mubr.bf16.gmra.mrb[0].mxu0 %v2282
        %v2659 = vpop.f32.mrb[0].mxu0
        %v2660 = vadd.f32 %v2451, %v2659
        %v2661 = vpop.f32.mrb[0].mxu0
        %v2662 = vpop.f32.mrb[0].mxu0
        %v2663 = vadd.f32 %v2454, %v2662
        %v2664 = vpop.f32.mrb[0].mxu0
        %2665 = vmatprep.mubr.bf16.mxu0 0
        %2666 = vmatmul.mubr.bf16.gmra.mrb[0].mxu0 %v2283
        %v2667 = vpop.f32.mrb[0].mxu0
        %v2668 = vadd.f32 %v2459, %v2667
        %v2669 = vpop.f32.mrb[0].mxu0
        %v2670 = vpop.f32.mrb[0].mxu0
        %v2671 = vadd.f32 %v2462, %v2670
        %v2672 = vpop.f32.mrb[0].mxu0
        %2673 = vmatprep.mubr.bf16.mxu0 0
        %2674 = vmatmul.mubr.bf16.gmra.mrb[0].mxu0 %v2284
        %v2675 = vpop.f32.mrb[0].mxu0
        %v2676 = vadd.f32 %v2467, %v2675
        %v2677 = vpop.f32.mrb[0].mxu0
        %v2678 = vpop.f32.mrb[0].mxu0
        %v2679 = vadd.f32 %v2470, %v2678
        %v2680 = vpop.f32.mrb[0].mxu0
        %2681 = vmatprep.mubr.bf16.mxu0 0
        %2682 = vmatmul.mubr.bf16.gmra.mrb[0].mxu0 %v2285
        %v2683 = vpop.f32.mrb[0].mxu0
        %v2684 = vadd.f32 %v2475, %v2683
        %v2685 = vpop.f32.mrb[0].mxu0
        %v2686 = vpop.f32.mrb[0].mxu0
        %v2687 = vadd.f32 %v2478, %v2686
        %v2688 = vpop.f32.mrb[0].mxu0
        %2689 = vmatprep.mubr.bf16.mxu0 0
        %2690 = vmatmul.mubr.bf16.gmra.mrb[0].mxu0 %v2286
        %v2691 = vpop.f32.mrb[0].mxu0
        %v2692 = vadd.f32 %v2483, %v2691
        %v2693 = vpop.f32.mrb[0].mxu0
        %v2694 = vpop.f32.mrb[0].mxu0
        %v2695 = vadd.f32 %v2486, %v2694
        %v2696 = vpop.f32.mrb[0].mxu0
        %2697 = vmatprep.mubr.bf16.mxu0 0
        %2698 = vmatmul.mubr.bf16.gmra.mrb[0].mxu0 %v2287
        %v2699 = vpop.f32.mrb[0].mxu0
        %v2700 = vadd.f32 %v2491, %v2699
        %v2701 = vpop.f32.mrb[0].mxu0
        %v2702 = vpop.f32.mrb[0].mxu0
        %v2703 = vadd.f32 %v2494, %v2702
        %v2704 = vpop.f32.mrb[0].mxu0
        %2705 = vdwg.mxu0
        %v2707 = vlaneseq
        %v2708 = vshrl.u32 %v2707, 7
        %v2709 = vsub.s32 0, %v2708
        %v2710 = vrot.slane %v403, %v2709
        %v2712 = vadd.f32 %v2580, %v2710
        %v2713 = vadd.f32 %v2583, %v2710
        %v2714 = vadd.f32 %v2588, %v2710
        %v2715 = vadd.f32 %v2591, %v2710
        %v2716 = vadd.f32 %v2596, %v2710
        %v2717 = vadd.f32 %v2599, %v2710
        %v2718 = vadd.f32 %v2604, %v2710
        %v2719 = vadd.f32 %v2607, %v2710
        %v2720 = vadd.f32 %v2612, %v2710
        %v2721 = vadd.f32 %v2615, %v2710
        %v2722 = vadd.f32 %v2620, %v2710
        %v2723 = vadd.f32 %v2623, %v2710
        %v2724 = vadd.f32 %v2628, %v2710
        %v2725 = vadd.f32 %v2631, %v2710
        %v2726 = vadd.f32 %v2636, %v2710
        %v2727 = vadd.f32 %v2639, %v2710
        %v2728 = vadd.f32 %v2644, %v2710
        %v2729 = vadd.f32 %v2647, %v2710
        %v2730 = vadd.f32 %v2652, %v2710
        %v2731 = vadd.f32 %v2655, %v2710
        %v2732 = vadd.f32 %v2660, %v2710
        %v2733 = vadd.f32 %v2663, %v2710
        %v2734 = vadd.f32 %v2668, %v2710
        %v2735 = vadd.f32 %v2671, %v2710
        %v2736 = vadd.f32 %v2676, %v2710
        %v2737 = vadd.f32 %v2679, %v2710
        %v2738 = vadd.f32 %v2684, %v2710
        %v2739 = vadd.f32 %v2687, %v2710
        %v2740 = vadd.f32 %v2692, %v2710
        %v2741 = vadd.f32 %v2695, %v2710
        %v2742 = vadd.f32 %v2700, %v2710
        %v2743 = vadd.f32 %v2703, %v2710
        %2744 = vst [vmem:[%s297] sm:$0xff] %v2712
        %2745 = vst [vmem:[%s297 + $0x8] sm:$0xff] %v2713
        %2746 = vst [vmem:[%s297 + $0x10] sm:$0xff] %v2714
        %2747 = vst [vmem:[%s297 + $0x18] sm:$0xff] %v2715
        %2748 = vst [vmem:[%s297 + $0x20] sm:$0xff] %v2716
        %2749 = vst [vmem:[%s297 + $0x28] sm:$0xff] %v2717
        %2750 = vst [vmem:[%s297 + $0x30] sm:$0xff] %v2718
        %2751 = vst [vmem:[%s297 + $0x38] sm:$0xff] %v2719
        %2752 = vst [vmem:[%s297 + $0x40] sm:$0xff] %v2720
        %2753 = vst [vmem:[%s297 + $0x48] sm:$0xff] %v2721
        %2754 = vst [vmem:[%s297 + $0x50] sm:$0xff] %v2722
        %2755 = vst [vmem:[%s297 + $0x58] sm:$0xff] %v2723
        %2756 = vst [vmem:[%s297 + $0x60] sm:$0xff] %v2724
        %2757 = vst [vmem:[%s297 + $0x68] sm:$0xff] %v2725
        %2758 = vst [vmem:[%s297 + $0x70] sm:$0xff] %v2726
        %2759 = vst [vmem:[%s297 + $0x78] sm:$0xff] %v2727
        %2760 = vst [vmem:[%s297 + $0x80] sm:$0xff] %v2728
        %2761 = vst [vmem:[%s297 + $0x88] sm:$0xff] %v2729
        %2762 = vst [vmem:[%s297 + $0x90] sm:$0xff] %v2730
        %2763 = vst [vmem:[%s297 + $0x98] sm:$0xff] %v2731
        %2764 = vst [vmem:[%s297 + $0xa0] sm:$0xff] %v2732
        %2765 = vst [vmem:[%s297 + $0xa8] sm:$0xff] %v2733
        %2766 = vst [vmem:[%s297 + $0xb0] sm:$0xff] %v2734
        %2767 = vst [vmem:[%s297 + $0xb8] sm:$0xff] %v2735
        %2768 = vst [vmem:[%s297 + $0xc0] sm:$0xff] %v2736
        %2769 = vst [vmem:[%s297 + $0xc8] sm:$0xff] %v2737
        %2770 = vst [vmem:[%s297 + $0xd0] sm:$0xff] %v2738
        %2771 = vst [vmem:[%s297 + $0xd8] sm:$0xff] %v2739
        %2772 = vst [vmem:[%s297 + $0xe0] sm:$0xff] %v2740
        %2773 = vst [vmem:[%s297 + $0xe8] sm:$0xff] %v2741
        %2774 = vst [vmem:[%s297 + $0xf0] sm:$0xff] %v2742
        %2775 = vst [vmem:[%s297 + $0xf8] sm:$0xff] %v2743
      $region52: #{graphsage_forward.1} parent=43 // pred_fallthru
        _
      %s2776 = smul.u32 32, %s22
      %p2777 = scmp.lt.s32.totalorder %s2776, 31
      %s2778 = scalar_select %p2777, %s2776, 31
      %s2779 = smul.addr %s2778, 8
      %s2780 = scalar_lea.vmem %s6, %s2779
      // Predicated region
      $region53: #{graphsage_forward.1} parent=43 // pred_check
        %p2781 = pneg %p188
      $region54: #{graphsage_forward.1} parent=43 // pred_check_branch
        %2783 = sbr.rel (%p2781) target = $region56
      $region55: #{graphsage_forward.1} parent=43 // pred_region
        %s2784 = smul.u32 32, %s22
      $region56: #{graphsage_forward.1} parent=43 // pred_fallthru
        _
      // Predicated region
      $region57: #{graphsage_forward.1} parent=43 // pred_check
        %p2785 = pneg %p188
      $region58: #{graphsage_forward.1} parent=43 // pred_check_branch
        %2787 = sbr.rel (%p2785) target = $region60
      $region59: #{graphsage_forward.1} parent=43 // pred_region
        %s2788 = smul.u32 32, %s22
        %p2789 = scmp.lt.s32.totalorder %s2788, 31
        %s2790 = scalar_select %p2789, %s2788, 31
        %s2791 = smul.addr %s2790, 8
        %s2792 = scalar_lea.vmem %s6, %s2791
      $region60: #{graphsage_forward.1} parent=43 // pred_fallthru
        _
    $region44: #{graphsage_forward.1} parent=5 // pred_fallthru
      _
    %p2793 = scmp.le.s32.totalorder 2, %s12
    // Predicated region
    $region61: #{graphsage_forward.1} parent=5 // pred_check
      %p2794 = pneg %p2793
    $region62: #{graphsage_forward.1} parent=5 // pred_check_branch
      %2796 = sbr.rel (%p2794) target = $region64
    $region63: #{graphsage_forward.1} parent=5 // pred_region
      %s2797 = ssub.s32 %s12, 2
    $region64: #{graphsage_forward.1} parent=5 // pred_fallthru
      _
  $region6: #{graphsage_forward.1} parent=0 // loop_footer
    %s16 = sadd.s32 1, %s12
  $region7: #{graphsage_forward.1} parent=0 // loop_footer_branch
    %11 = sbr.rel target = $region3
  $region8: #{graphsage_forward.1} parent=0 // loop_exit
    _

</llo_original>
